<compile_context>
chip_gen: v7x
topology: tpu7x:2x2x1
jax: 0.10.0
libtpu: 0.0.40
codegen_flags: <defaults>
</compile_context>

<pallas_src>
import jax
import jax.numpy as jnp
from jax.experimental import pallas as pl
from jax.experimental.pallas import tpu as pltpu

# Small, synthetic config (cfg.num_channels / cfg.decision_window)
NUM_CHANNELS = 16        # cfg.num_channels
DECISION_WINDOW = 32     # cfg.decision_window
BATCH = 2
KSIZE = 17               # conv kernel height (time axis)
NFILT = 100              # conv out_channels / fc1 width
NCLASS = 26              # fc2 out_features
LANE = 128               # padded logits width (lane-dense output)
LN_EPS = 1e-5
WINDOWS_PER_BLOCK = 8    # decision windows per grid step (256 rows/step when B>=8)


def cnn_baseline_kernel(x_ref, pvec_ref, cw_ref, w1_ref, w2_ref, o_ref, pad_ref):
    BT, C = x_ref.shape                  # (BB*T, C) rows for this grid step
    BB = o_ref.shape[0]                  # windows in this block
    T = BT // BB
    KC, F = cw_ref.shape                 # (K*C, 100)
    K = KC // C
    half = K // 2                        # = 8, matches PyTorch padding=(8, 0)

    # ---- packed small parameters (one DMA, VMEM-resident across grid steps) ----
    gamma = pvec_ref[0:1, :C]            # (1, C)
    beta = pvec_ref[1:2, :C]             # (1, C)
    conv_b = pvec_ref[2:3, :F]           # (1, F)
    b1 = pvec_ref[3:4, :F]               # (1, F)
    b2 = pvec_ref[4:5, :]                # (1, 128)  (zeros beyond NCLASS)

    # ---- LayerNorm over channel axis (last dim), biased variance ----
    x = x_ref[...]                                            # (BT, C) f32
    mean = jnp.mean(x, axis=-1, keepdims=True)
    var = jnp.mean(jnp.square(x - mean), axis=-1, keepdims=True)
    xn = (x - mean) * jax.lax.rsqrt(var + LN_EPS) * gamma + beta

    # ---- row-padded copy of xn (3 sublane-aligned stores: 2 halos + body) ----
    pad_ref[0:half, :] = jnp.zeros((half, C), jnp.float32)
    pad_ref[half + BT:half + BT + half, :] = jnp.zeros((half, C), jnp.float32)
    pad_ref[half:half + BT, :] = xn

    # per-row time index t = r mod T, built without integer div/mod
    r_col = jax.lax.broadcasted_iota(jnp.int32, (BT, 1), 0)
    t_idx = r_col
    for b in range(1, BB):
        t_idx = jnp.where(r_col >= b * T, r_col - b * T, t_idx)

    # ---- build the im2col LHS fully IN-REGISTER: 17 masked, shifted taps
    #      concatenated along the lane axis, single cast to bf16 ----
    taps = []
    for k in range(K):
        src_t = t_idx + (k - half)
        valid = jnp.logical_and(src_t >= 0, src_t < T)       # window/batch edges
        taps.append(jnp.where(valid, pad_ref[k:k + BT, :], 0.0))
    lhs = jnp.concatenate(taps, axis=-1).astype(jnp.bfloat16)  # (BT, K*C) bf16

    # ---- Conv2d as ONE MXU matmul: (BT, K*C) @ (K*C, F), f32 accumulation ----
    conv = jnp.dot(lhs, cw_ref[...],
                   preferred_element_type=jnp.float32) + conv_b   # (BT, F)
    relu = jnp.maximum(conv, 0.0)

    # ---- AvgPool over each window as a selection matmul (stays 2-D, lane-dense) ----
    b_idx = jax.lax.broadcasted_iota(jnp.int32, (BB, BT), 0)
    r_idx = jax.lax.broadcasted_iota(jnp.int32, (BB, BT), 1)
    lo = b_idx * T
    inside = jnp.logical_and(r_idx >= lo, r_idx < lo + T)
    sel = jnp.where(inside, 1.0 / T, 0.0)                        # (BB, BT) f32
    pooled = jnp.dot(sel, relu, preferred_element_type=jnp.float32)  # (BB, F)

    # ---- fc1 -> sigmoid (EUP exp + approx reciprocal) -> fc2 (128-lane padded) ----
    h_pre = jnp.dot(pooled.astype(jnp.bfloat16), w1_ref[...],
                    preferred_element_type=jnp.float32) + b1
    h = pl.reciprocal(1.0 + jnp.exp(-h_pre), approx=True)
    out = jnp.dot(h.astype(jnp.bfloat16), w2_ref[...],
                  preferred_element_type=jnp.float32) + b2        # (BB, 128)
    o_ref[...] = out.astype(o_ref.dtype)


@jax.jit
def cnn_baseline_forward(x, pvec, cw_flat, w1_bf, w2_bf):
    B, T, C = x.shape
    BB = min(B, WINDOWS_PER_BLOCK)          # windows per grid step
    num_blocks = (B + BB - 1) // BB
    B_pad = num_blocks * BB

    x2d = x.reshape(B * T, C)               # kernel never merges leading dims
    if B_pad != B:                          # pad to a whole number of blocks
        x2d = jnp.concatenate(
            [x2d, jnp.zeros(((B_pad - B) * T, C), x2d.dtype)], axis=0)

    KC, F = cw_flat.shape
    n_out = w2_bf.shape[1]                  # 128 (lane-dense padded logits)

    flops = int(2 * B_pad * T * KC * F        # conv matmul
                + 2 * B_pad * BB * T * F      # pooling selection matmul
                + 2 * B_pad * F * F           # fc1
                + 2 * B_pad * F * n_out)      # fc2
    transcendentals = int(B_pad * T + 2 * B_pad * F)   # rsqrt + exp + reciprocal
    bytes_accessed = int(B_pad * T * C * 4 + pvec.size * 4 + cw_flat.size * 2
                         + w1_bf.size * 2 + w2_bf.size * 2 + B_pad * n_out * 4)

    out = pl.pallas_call(
        cnn_baseline_kernel,
        out_shape=jax.ShapeDtypeStruct((B_pad, n_out), jnp.float32),
        grid=(num_blocks,),
        in_specs=[
            pl.BlockSpec((BB * T, C), lambda i: (i, 0)),   # x rows for this block
            pl.BlockSpec((8, 128), lambda i: (0, 0)),      # packed params (resident)
            pl.BlockSpec((KC, F), lambda i: (0, 0)),       # conv weight (resident)
            pl.BlockSpec((F, F), lambda i: (0, 0)),        # fc1 weight (resident)
            pl.BlockSpec((F, n_out), lambda i: (0, 0)),    # fc2 weight (resident)
        ],
        out_specs=pl.BlockSpec((BB, n_out), lambda i: (i, 0)),
        scratch_shapes=[
            pltpu.VMEM((BB * T + KSIZE - 1, C), jnp.float32),  # row-padded xn
        ],
        compiler_params=pltpu.CompilerParams(
            dimension_semantics=("parallel",)),
        cost_estimate=pl.CostEstimate(flops=flops,
                                      transcendentals=transcendentals,
                                      bytes_accessed=bytes_accessed),
    )(x2d, pvec, cw_flat, w1_bf, w2_bf)
    return out[:B, :NCLASS]


def make_params(key):
    """Deterministic synthetic parameters matching the PyTorch module shapes."""
    k_cw, k_cb, k_w1, k_b1, k_w2, k_b2 = jax.random.split(key, 6)
    C, K, F = NUM_CHANNELS, KSIZE, NFILT
    gamma = jnp.ones((C,), jnp.float32)                 # LayerNorm default init
    beta = jnp.zeros((C,), jnp.float32)
    # Conv2d weight (100, 1, 17, C) -> stored as (17, C, 100) so conv is x @ W_k
    conv_w_pt = jax.random.normal(k_cw, (F, 1, K, C), jnp.float32) * (1.0 / jnp.sqrt(K * C))
    conv_w = jnp.transpose(conv_w_pt[:, 0], (1, 2, 0))  # (K, C, F)
    conv_b = jax.random.normal(k_cb, (F,), jnp.float32) * 0.05
    w1 = jax.random.normal(k_w1, (F, F), jnp.float32) * (1.0 / jnp.sqrt(F))
    b1 = jax.random.normal(k_b1, (F,), jnp.float32) * 0.05
    w2 = jax.random.normal(k_w2, (F, NCLASS), jnp.float32) * (1.0 / jnp.sqrt(F))
    b2 = jax.random.normal(k_b2, (NCLASS,), jnp.float32) * 0.05
    return gamma, beta, conv_w, conv_b, w1, b1, w2, b2


def prepare_inputs(gamma, beta, conv_w, conv_b, w1, b1, w2, b2):
    """One-time, outside-the-kernel packing: tiny vectors -> one (8,128) f32 slab,
    conv weight flattened to (K*C, F) bf16, fc weights bf16, fc2 zero-padded to
    128 output lanes (lane-dense kernel output)."""
    C, F, K = NUM_CHANNELS, NFILT, KSIZE
    pvec = jnp.zeros((8, 128), jnp.float32)
    pvec = pvec.at[0, :C].set(gamma)
    pvec = pvec.at[1, :C].set(beta)
    pvec = pvec.at[2, :F].set(conv_b)
    pvec = pvec.at[3, :F].set(b1)
    pvec = pvec.at[4, :NCLASS].set(b2)
    cw_flat = conv_w.reshape(K * C, F).astype(jnp.bfloat16)
    w2_pad = jnp.zeros((F, LANE), jnp.float32).at[:, :NCLASS].set(w2).astype(jnp.bfloat16)
    return pvec, cw_flat, w1.astype(jnp.bfloat16), w2_pad


def reference_forward(x, gamma, beta, conv_w, conv_b, w1, b1, w2, b2):
    """Pure-JAX f32 reference with identical semantics (for validation)."""
    B, T, C = x.shape
    K, _, F = conv_w.shape
    mean = x.mean(-1, keepdims=True)
    var = ((x - mean) ** 2).mean(-1, keepdims=True)
    xn = (x - mean) / jnp.sqrt(var + LN_EPS) * gamma + beta
    xp = jnp.pad(xn, ((0, 0), (K // 2, K // 2), (0, 0)))
    conv = jnp.zeros((B, T, F), jnp.float32)
    for k in range(K):
        conv = conv + jnp.einsum('btc,cf->btf', xp[:, k:k + T, :], conv_w[k])
    conv = conv + conv_b
    relu = jnp.maximum(conv, 0.0)
    pooled = relu.mean(axis=1)
    h = jax.nn.sigmoid(pooled @ w1 + b1)
    return h @ w2 + b2


if __name__ == "__main__":
    key = jax.random.PRNGKey(0)
    k_x, k_p = jax.random.split(key)
    x = jax.random.normal(k_x, (BATCH, DECISION_WINDOW, NUM_CHANNELS), jnp.float32)
    params = make_params(k_p)
    packed = prepare_inputs(*params)

    out = cnn_baseline_forward(x, *packed)
    out = jax.block_until_ready(out)

    ref = reference_forward(x, *params)
    assert out.shape == (BATCH, NCLASS)
    # bf16 MXU operands (f32 accumulation) -> slightly looser tolerance than pure f32.
    assert jnp.allclose(out, ref, atol=2e-2, rtol=2e-2), "Pallas kernel mismatch vs reference"

    print("KERNEL_OK")
</pallas_src>

<mosaic_0001>
module attributes {stable_mosaic.version = 11 : i64} {
  func.func @cnn_baseline_kernel(%arg0: i32, %arg1: memref<64x16xf32, #tpu.memory_space<vmem>>, %arg2: memref<8x128xf32, #tpu.memory_space<vmem>>, %arg3: memref<272x100xbf16, #tpu.memory_space<vmem>>, %arg4: memref<100x100xbf16, #tpu.memory_space<vmem>>, %arg5: memref<100x128xbf16, #tpu.memory_space<vmem>>, %arg6: memref<2x128xf32, #tpu.memory_space<vmem>>, %arg7: memref<80x16xf32, #tpu.memory_space<vmem>>) attributes {dimension_semantics = [#tpu.dimension_semantics<parallel>], iteration_bounds = array<i64: 1>, scalar_prefetch = 0 : i64, scratch_operands = 1 : i64, tpu.core_type = #tpu.core_type<tc>, window_params = [{transform_indices = @transform_0, window_bounds = array<i64: 64, 16>}, {pipeline_mode = #tpu.pipeline_mode<synchronous>, transform_indices = @transform_1, window_bounds = array<i64: 8, 128>}, {pipeline_mode = #tpu.pipeline_mode<synchronous>, transform_indices = @transform_2, window_bounds = array<i64: 272, 100>}, {pipeline_mode = #tpu.pipeline_mode<synchronous>, transform_indices = @transform_3, window_bounds = array<i64: 100, 100>}, {pipeline_mode = #tpu.pipeline_mode<synchronous>, transform_indices = @transform_4, window_bounds = array<i64: 100, 128>}, {transform_indices = @transform_5, window_bounds = array<i64: 2, 128>}]} {
    %c0 = arith.constant 0 : index
    %c0_0 = arith.constant 0 : index
    %0 = vector.load %arg2[%c0, %c0_0] : memref<8x128xf32, #tpu.memory_space<vmem>>, vector<1x16xf32>
    %c1 = arith.constant 1 : index
    %c0_1 = arith.constant 0 : index
    %1 = vector.load %arg2[%c1, %c0_1] : memref<8x128xf32, #tpu.memory_space<vmem>>, vector<1x16xf32>
    %c2 = arith.constant 2 : index
    %c0_2 = arith.constant 0 : index
    %2 = vector.load %arg2[%c2, %c0_2] : memref<8x128xf32, #tpu.memory_space<vmem>>, vector<1x100xf32>
    %c3 = arith.constant 3 : index
    %c0_3 = arith.constant 0 : index
    %3 = vector.load %arg2[%c3, %c0_3] : memref<8x128xf32, #tpu.memory_space<vmem>>, vector<1x100xf32>
    %c4 = arith.constant 4 : index
    %c0_4 = arith.constant 0 : index
    %4 = vector.load %arg2[%c4, %c0_4] : memref<8x128xf32, #tpu.memory_space<vmem>>, vector<1x128xf32>
    %c0_5 = arith.constant 0 : index
    %c0_6 = arith.constant 0 : index
    %5 = vector.load %arg1[%c0_5, %c0_6] : memref<64x16xf32, #tpu.memory_space<vmem>>, vector<64x16xf32>
    %cst = arith.constant dense<0.000000e+00> : vector<64xf32>
    %6 = vector.multi_reduction <add>, %5, %cst [1] : vector<64x16xf32> to vector<64xf32>
    %7 = vector.shape_cast %6 : vector<64xf32> to vector<64x1xf32>
    %cst_7 = arith.constant 1.600000e+01 : f32
    %8 = vector.broadcast %cst_7 : f32 to vector<64x1xf32>
    %9 = arith.divf %7, %8 : vector<64x1xf32>
    %10 = vector.broadcast %9 : vector<64x1xf32> to vector<64x16xf32>
    %11 = arith.subf %5, %10 : vector<64x16xf32>
    %12 = arith.mulf %11, %11 : vector<64x16xf32>
    %cst_8 = arith.constant dense<0.000000e+00> : vector<64xf32>
    %13 = vector.multi_reduction <add>, %12, %cst_8 [1] : vector<64x16xf32> to vector<64xf32>
    %14 = vector.shape_cast %13 : vector<64xf32> to vector<64x1xf32>
    %cst_9 = arith.constant 1.600000e+01 : f32
    %15 = vector.broadcast %cst_9 : f32 to vector<64x1xf32>
    %16 = arith.divf %14, %15 : vector<64x1xf32>
    %17 = vector.broadcast %9 : vector<64x1xf32> to vector<64x16xf32>
    %18 = arith.subf %5, %17 : vector<64x16xf32>
    %cst_10 = arith.constant 9.99999974E-6 : f32
    %19 = vector.broadcast %cst_10 : f32 to vector<64x1xf32>
    %20 = arith.addf %16, %19 : vector<64x1xf32>
    %21 = math.rsqrt %20 : vector<64x1xf32>
    %22 = vector.broadcast %21 : vector<64x1xf32> to vector<64x16xf32>
    %23 = arith.mulf %18, %22 : vector<64x16xf32>
    %24 = vector.broadcast %0 : vector<1x16xf32> to vector<64x16xf32>
    %25 = arith.mulf %23, %24 : vector<64x16xf32>
    %26 = vector.broadcast %1 : vector<1x16xf32> to vector<64x16xf32>
    %27 = arith.addf %25, %26 : vector<64x16xf32>
    %cst_11 = arith.constant 0.000000e+00 : f32
    %28 = vector.broadcast %cst_11 : f32 to vector<8x16xf32>
    %c0_12 = arith.constant 0 : index
    %c0_13 = arith.constant 0 : index
    %29 = vector.load %arg7[%c0_12, %c0_13] : memref<80x16xf32, #tpu.memory_space<vmem>>, vector<8x16xf32>
    tpu.vector_store %arg7[%c0_12, %c0_13], %28 {strides = array<i32>} : memref<80x16xf32, #tpu.memory_space<vmem>>, vector<8x16xf32>,
    %cst_14 = arith.constant 0.000000e+00 : f32
    %30 = vector.broadcast %cst_14 : f32 to vector<8x16xf32>
    %c72 = arith.constant 72 : index
    %c0_15 = arith.constant 0 : index
    %31 = vector.load %arg7[%c72, %c0_15] : memref<80x16xf32, #tpu.memory_space<vmem>>, vector<8x16xf32>
    tpu.vector_store %arg7[%c72, %c0_15], %30 {strides = array<i32>} : memref<80x16xf32, #tpu.memory_space<vmem>>, vector<8x16xf32>,
    %c8 = arith.constant 8 : index
    %c0_16 = arith.constant 0 : index
    %32 = vector.load %arg7[%c8, %c0_16] : memref<80x16xf32, #tpu.memory_space<vmem>>, vector<64x16xf32>
    tpu.vector_store %arg7[%c8, %c0_16], %27 {strides = array<i32>} : memref<80x16xf32, #tpu.memory_space<vmem>>, vector<64x16xf32>,
    %33 = tpu.iota {dimensions = array<i32: 0>} : vector<64x1xi32>
    %c32_i32 = arith.constant 32 : i32
    %34 = vector.broadcast %c32_i32 : i32 to vector<64x1xi32>
    %35 = arith.cmpi sge, %33, %34 : vector<64x1xi32>
    %c32_i32_17 = arith.constant 32 : i32
    %36 = vector.broadcast %c32_i32_17 : i32 to vector<64x1xi32>
    %37 = arith.subi %33, %36 : vector<64x1xi32>
    %38 = arith.select %35, %37, %33 : vector<64x1xi1>, vector<64x1xi32>
    %c-8_i32 = arith.constant -8 : i32
    %39 = vector.broadcast %c-8_i32 : i32 to vector<64x1xi32>
    %40 = arith.addi %38, %39 : vector<64x1xi32>
    %c0_i32 = arith.constant 0 : i32
    %41 = vector.broadcast %c0_i32 : i32 to vector<64x1xi32>
    %42 = arith.cmpi sge, %40, %41 : vector<64x1xi32>
    %c32_i32_18 = arith.constant 32 : i32
    %43 = vector.broadcast %c32_i32_18 : i32 to vector<64x1xi32>
    %44 = arith.cmpi slt, %40, %43 : vector<64x1xi32>
    %45 = arith.andi %42, %44 : vector<64x1xi1>
    %c0_19 = arith.constant 0 : index
    %c0_20 = arith.constant 0 : index
    %46 = vector.load %arg7[%c0_19, %c0_20] : memref<80x16xf32, #tpu.memory_space<vmem>>, vector<64x16xf32>
    %cst_21 = arith.constant 0.000000e+00 : f32
    %47 = vector.shape_cast %45 : vector<64x1xi1> to vector<64x1xi1>
    %48 = vector.broadcast %47 : vector<64x1xi1> to vector<64x16xi1>
    %49 = vector.broadcast %cst_21 : f32 to vector<64x16xf32>
    %50 = arith.select %48, %46, %49 : vector<64x16xi1>, vector<64x16xf32>
    %c-7_i32 = arith.constant -7 : i32
    %51 = vector.broadcast %c-7_i32 : i32 to vector<64x1xi32>
    %52 = arith.addi %38, %51 : vector<64x1xi32>
    %c0_i32_22 = arith.constant 0 : i32
    %53 = vector.broadcast %c0_i32_22 : i32 to vector<64x1xi32>
    %54 = arith.cmpi sge, %52, %53 : vector<64x1xi32>
    %c32_i32_23 = arith.constant 32 : i32
    %55 = vector.broadcast %c32_i32_23 : i32 to vector<64x1xi32>
    %56 = arith.cmpi slt, %52, %55 : vector<64x1xi32>
    %57 = arith.andi %54, %56 : vector<64x1xi1>
    %c1_24 = arith.constant 1 : index
    %c0_25 = arith.constant 0 : index
    %58 = vector.load %arg7[%c1_24, %c0_25] : memref<80x16xf32, #tpu.memory_space<vmem>>, vector<64x16xf32>
    %cst_26 = arith.constant 0.000000e+00 : f32
    %59 = vector.shape_cast %57 : vector<64x1xi1> to vector<64x1xi1>
    %60 = vector.broadcast %59 : vector<64x1xi1> to vector<64x16xi1>
    %61 = vector.broadcast %cst_26 : f32 to vector<64x16xf32>
    %62 = arith.select %60, %58, %61 : vector<64x16xi1>, vector<64x16xf32>
    %c-6_i32 = arith.constant -6 : i32
    %63 = vector.broadcast %c-6_i32 : i32 to vector<64x1xi32>
    %64 = arith.addi %38, %63 : vector<64x1xi32>
    %c0_i32_27 = arith.constant 0 : i32
    %65 = vector.broadcast %c0_i32_27 : i32 to vector<64x1xi32>
    %66 = arith.cmpi sge, %64, %65 : vector<64x1xi32>
    %c32_i32_28 = arith.constant 32 : i32
    %67 = vector.broadcast %c32_i32_28 : i32 to vector<64x1xi32>
    %68 = arith.cmpi slt, %64, %67 : vector<64x1xi32>
    %69 = arith.andi %66, %68 : vector<64x1xi1>
    %c2_29 = arith.constant 2 : index
    %c0_30 = arith.constant 0 : index
    %70 = vector.load %arg7[%c2_29, %c0_30] : memref<80x16xf32, #tpu.memory_space<vmem>>, vector<64x16xf32>
    %cst_31 = arith.constant 0.000000e+00 : f32
    %71 = vector.shape_cast %69 : vector<64x1xi1> to vector<64x1xi1>
    %72 = vector.broadcast %71 : vector<64x1xi1> to vector<64x16xi1>
    %73 = vector.broadcast %cst_31 : f32 to vector<64x16xf32>
    %74 = arith.select %72, %70, %73 : vector<64x16xi1>, vector<64x16xf32>
    %c-5_i32 = arith.constant -5 : i32
    %75 = vector.broadcast %c-5_i32 : i32 to vector<64x1xi32>
    %76 = arith.addi %38, %75 : vector<64x1xi32>
    %c0_i32_32 = arith.constant 0 : i32
    %77 = vector.broadcast %c0_i32_32 : i32 to vector<64x1xi32>
    %78 = arith.cmpi sge, %76, %77 : vector<64x1xi32>
    %c32_i32_33 = arith.constant 32 : i32
    %79 = vector.broadcast %c32_i32_33 : i32 to vector<64x1xi32>
    %80 = arith.cmpi slt, %76, %79 : vector<64x1xi32>
    %81 = arith.andi %78, %80 : vector<64x1xi1>
    %c3_34 = arith.constant 3 : index
    %c0_35 = arith.constant 0 : index
    %82 = vector.load %arg7[%c3_34, %c0_35] : memref<80x16xf32, #tpu.memory_space<vmem>>, vector<64x16xf32>
    %cst_36 = arith.constant 0.000000e+00 : f32
    %83 = vector.shape_cast %81 : vector<64x1xi1> to vector<64x1xi1>
    %84 = vector.broadcast %83 : vector<64x1xi1> to vector<64x16xi1>
    %85 = vector.broadcast %cst_36 : f32 to vector<64x16xf32>
    %86 = arith.select %84, %82, %85 : vector<64x16xi1>, vector<64x16xf32>
    %c-4_i32 = arith.constant -4 : i32
    %87 = vector.broadcast %c-4_i32 : i32 to vector<64x1xi32>
    %88 = arith.addi %38, %87 : vector<64x1xi32>
    %c0_i32_37 = arith.constant 0 : i32
    %89 = vector.broadcast %c0_i32_37 : i32 to vector<64x1xi32>
    %90 = arith.cmpi sge, %88, %89 : vector<64x1xi32>
    %c32_i32_38 = arith.constant 32 : i32
    %91 = vector.broadcast %c32_i32_38 : i32 to vector<64x1xi32>
    %92 = arith.cmpi slt, %88, %91 : vector<64x1xi32>
    %93 = arith.andi %90, %92 : vector<64x1xi1>
    %c4_39 = arith.constant 4 : index
    %c0_40 = arith.constant 0 : index
    %94 = vector.load %arg7[%c4_39, %c0_40] : memref<80x16xf32, #tpu.memory_space<vmem>>, vector<64x16xf32>
    %cst_41 = arith.constant 0.000000e+00 : f32
    %95 = vector.shape_cast %93 : vector<64x1xi1> to vector<64x1xi1>
    %96 = vector.broadcast %95 : vector<64x1xi1> to vector<64x16xi1>
    %97 = vector.broadcast %cst_41 : f32 to vector<64x16xf32>
    %98 = arith.select %96, %94, %97 : vector<64x16xi1>, vector<64x16xf32>
    %c-3_i32 = arith.constant -3 : i32
    %99 = vector.broadcast %c-3_i32 : i32 to vector<64x1xi32>
    %100 = arith.addi %38, %99 : vector<64x1xi32>
    %c0_i32_42 = arith.constant 0 : i32
    %101 = vector.broadcast %c0_i32_42 : i32 to vector<64x1xi32>
    %102 = arith.cmpi sge, %100, %101 : vector<64x1xi32>
    %c32_i32_43 = arith.constant 32 : i32
    %103 = vector.broadcast %c32_i32_43 : i32 to vector<64x1xi32>
    %104 = arith.cmpi slt, %100, %103 : vector<64x1xi32>
    %105 = arith.andi %102, %104 : vector<64x1xi1>
    %c5 = arith.constant 5 : index
    %c0_44 = arith.constant 0 : index
    %106 = vector.load %arg7[%c5, %c0_44] : memref<80x16xf32, #tpu.memory_space<vmem>>, vector<64x16xf32>
    %cst_45 = arith.constant 0.000000e+00 : f32
    %107 = vector.shape_cast %105 : vector<64x1xi1> to vector<64x1xi1>
    %108 = vector.broadcast %107 : vector<64x1xi1> to vector<64x16xi1>
    %109 = vector.broadcast %cst_45 : f32 to vector<64x16xf32>
    %110 = arith.select %108, %106, %109 : vector<64x16xi1>, vector<64x16xf32>
    %c-2_i32 = arith.constant -2 : i32
    %111 = vector.broadcast %c-2_i32 : i32 to vector<64x1xi32>
    %112 = arith.addi %38, %111 : vector<64x1xi32>
    %c0_i32_46 = arith.constant 0 : i32
    %113 = vector.broadcast %c0_i32_46 : i32 to vector<64x1xi32>
    %114 = arith.cmpi sge, %112, %113 : vector<64x1xi32>
    %c32_i32_47 = arith.constant 32 : i32
    %115 = vector.broadcast %c32_i32_47 : i32 to vector<64x1xi32>
    %116 = arith.cmpi slt, %112, %115 : vector<64x1xi32>
    %117 = arith.andi %114, %116 : vector<64x1xi1>
    %c6 = arith.constant 6 : index
    %c0_48 = arith.constant 0 : index
    %118 = vector.load %arg7[%c6, %c0_48] : memref<80x16xf32, #tpu.memory_space<vmem>>, vector<64x16xf32>
    %cst_49 = arith.constant 0.000000e+00 : f32
    %119 = vector.shape_cast %117 : vector<64x1xi1> to vector<64x1xi1>
    %120 = vector.broadcast %119 : vector<64x1xi1> to vector<64x16xi1>
    %121 = vector.broadcast %cst_49 : f32 to vector<64x16xf32>
    %122 = arith.select %120, %118, %121 : vector<64x16xi1>, vector<64x16xf32>
    %c-1_i32 = arith.constant -1 : i32
    %123 = vector.broadcast %c-1_i32 : i32 to vector<64x1xi32>
    %124 = arith.addi %38, %123 : vector<64x1xi32>
    %c0_i32_50 = arith.constant 0 : i32
    %125 = vector.broadcast %c0_i32_50 : i32 to vector<64x1xi32>
    %126 = arith.cmpi sge, %124, %125 : vector<64x1xi32>
    %c32_i32_51 = arith.constant 32 : i32
    %127 = vector.broadcast %c32_i32_51 : i32 to vector<64x1xi32>
    %128 = arith.cmpi slt, %124, %127 : vector<64x1xi32>
    %129 = arith.andi %126, %128 : vector<64x1xi1>
    %c7 = arith.constant 7 : index
    %c0_52 = arith.constant 0 : index
    %130 = vector.load %arg7[%c7, %c0_52] : memref<80x16xf32, #tpu.memory_space<vmem>>, vector<64x16xf32>
    %cst_53 = arith.constant 0.000000e+00 : f32
    %131 = vector.shape_cast %129 : vector<64x1xi1> to vector<64x1xi1>
    %132 = vector.broadcast %131 : vector<64x1xi1> to vector<64x16xi1>
    %133 = vector.broadcast %cst_53 : f32 to vector<64x16xf32>
    %134 = arith.select %132, %130, %133 : vector<64x16xi1>, vector<64x16xf32>
    %c0_i32_54 = arith.constant 0 : i32
    %135 = vector.broadcast %c0_i32_54 : i32 to vector<64x1xi32>
    %136 = arith.addi %38, %135 : vector<64x1xi32>
    %c0_i32_55 = arith.constant 0 : i32
    %137 = vector.broadcast %c0_i32_55 : i32 to vector<64x1xi32>
    %138 = arith.cmpi sge, %136, %137 : vector<64x1xi32>
    %c32_i32_56 = arith.constant 32 : i32
    %139 = vector.broadcast %c32_i32_56 : i32 to vector<64x1xi32>
    %140 = arith.cmpi slt, %136, %139 : vector<64x1xi32>
    %141 = arith.andi %138, %140 : vector<64x1xi1>
    %c8_57 = arith.constant 8 : index
    %c0_58 = arith.constant 0 : index
    %142 = vector.load %arg7[%c8_57, %c0_58] : memref<80x16xf32, #tpu.memory_space<vmem>>, vector<64x16xf32>
    %cst_59 = arith.constant 0.000000e+00 : f32
    %143 = vector.shape_cast %141 : vector<64x1xi1> to vector<64x1xi1>
    %144 = vector.broadcast %143 : vector<64x1xi1> to vector<64x16xi1>
    %145 = vector.broadcast %cst_59 : f32 to vector<64x16xf32>
    %146 = arith.select %144, %142, %145 : vector<64x16xi1>, vector<64x16xf32>
    %c1_i32 = arith.constant 1 : i32
    %147 = vector.broadcast %c1_i32 : i32 to vector<64x1xi32>
    %148 = arith.addi %38, %147 : vector<64x1xi32>
    %c0_i32_60 = arith.constant 0 : i32
    %149 = vector.broadcast %c0_i32_60 : i32 to vector<64x1xi32>
    %150 = arith.cmpi sge, %148, %149 : vector<64x1xi32>
    %c32_i32_61 = arith.constant 32 : i32
    %151 = vector.broadcast %c32_i32_61 : i32 to vector<64x1xi32>
    %152 = arith.cmpi slt, %148, %151 : vector<64x1xi32>
    %153 = arith.andi %150, %152 : vector<64x1xi1>
    %c9 = arith.constant 9 : index
    %c0_62 = arith.constant 0 : index
    %154 = vector.load %arg7[%c9, %c0_62] : memref<80x16xf32, #tpu.memory_space<vmem>>, vector<64x16xf32>
    %cst_63 = arith.constant 0.000000e+00 : f32
    %155 = vector.shape_cast %153 : vector<64x1xi1> to vector<64x1xi1>
    %156 = vector.broadcast %155 : vector<64x1xi1> to vector<64x16xi1>
    %157 = vector.broadcast %cst_63 : f32 to vector<64x16xf32>
    %158 = arith.select %156, %154, %157 : vector<64x16xi1>, vector<64x16xf32>
    %c2_i32 = arith.constant 2 : i32
    %159 = vector.broadcast %c2_i32 : i32 to vector<64x1xi32>
    %160 = arith.addi %38, %159 : vector<64x1xi32>
    %c0_i32_64 = arith.constant 0 : i32
    %161 = vector.broadcast %c0_i32_64 : i32 to vector<64x1xi32>
    %162 = arith.cmpi sge, %160, %161 : vector<64x1xi32>
    %c32_i32_65 = arith.constant 32 : i32
    %163 = vector.broadcast %c32_i32_65 : i32 to vector<64x1xi32>
    %164 = arith.cmpi slt, %160, %163 : vector<64x1xi32>
    %165 = arith.andi %162, %164 : vector<64x1xi1>
    %c10 = arith.constant 10 : index
    %c0_66 = arith.constant 0 : index
    %166 = vector.load %arg7[%c10, %c0_66] : memref<80x16xf32, #tpu.memory_space<vmem>>, vector<64x16xf32>
    %cst_67 = arith.constant 0.000000e+00 : f32
    %167 = vector.shape_cast %165 : vector<64x1xi1> to vector<64x1xi1>
    %168 = vector.broadcast %167 : vector<64x1xi1> to vector<64x16xi1>
    %169 = vector.broadcast %cst_67 : f32 to vector<64x16xf32>
    %170 = arith.select %168, %166, %169 : vector<64x16xi1>, vector<64x16xf32>
    %c3_i32 = arith.constant 3 : i32
    %171 = vector.broadcast %c3_i32 : i32 to vector<64x1xi32>
    %172 = arith.addi %38, %171 : vector<64x1xi32>
    %c0_i32_68 = arith.constant 0 : i32
    %173 = vector.broadcast %c0_i32_68 : i32 to vector<64x1xi32>
    %174 = arith.cmpi sge, %172, %173 : vector<64x1xi32>
    %c32_i32_69 = arith.constant 32 : i32
    %175 = vector.broadcast %c32_i32_69 : i32 to vector<64x1xi32>
    %176 = arith.cmpi slt, %172, %175 : vector<64x1xi32>
    %177 = arith.andi %174, %176 : vector<64x1xi1>
    %c11 = arith.constant 11 : index
    %c0_70 = arith.constant 0 : index
    %178 = vector.load %arg7[%c11, %c0_70] : memref<80x16xf32, #tpu.memory_space<vmem>>, vector<64x16xf32>
    %cst_71 = arith.constant 0.000000e+00 : f32
    %179 = vector.shape_cast %177 : vector<64x1xi1> to vector<64x1xi1>
    %180 = vector.broadcast %179 : vector<64x1xi1> to vector<64x16xi1>
    %181 = vector.broadcast %cst_71 : f32 to vector<64x16xf32>
    %182 = arith.select %180, %178, %181 : vector<64x16xi1>, vector<64x16xf32>
    %c4_i32 = arith.constant 4 : i32
    %183 = vector.broadcast %c4_i32 : i32 to vector<64x1xi32>
    %184 = arith.addi %38, %183 : vector<64x1xi32>
    %c0_i32_72 = arith.constant 0 : i32
    %185 = vector.broadcast %c0_i32_72 : i32 to vector<64x1xi32>
    %186 = arith.cmpi sge, %184, %185 : vector<64x1xi32>
    %c32_i32_73 = arith.constant 32 : i32
    %187 = vector.broadcast %c32_i32_73 : i32 to vector<64x1xi32>
    %188 = arith.cmpi slt, %184, %187 : vector<64x1xi32>
    %189 = arith.andi %186, %188 : vector<64x1xi1>
    %c12 = arith.constant 12 : index
    %c0_74 = arith.constant 0 : index
    %190 = vector.load %arg7[%c12, %c0_74] : memref<80x16xf32, #tpu.memory_space<vmem>>, vector<64x16xf32>
    %cst_75 = arith.constant 0.000000e+00 : f32
    %191 = vector.shape_cast %189 : vector<64x1xi1> to vector<64x1xi1>
    %192 = vector.broadcast %191 : vector<64x1xi1> to vector<64x16xi1>
    %193 = vector.broadcast %cst_75 : f32 to vector<64x16xf32>
    %194 = arith.select %192, %190, %193 : vector<64x16xi1>, vector<64x16xf32>
    %c5_i32 = arith.constant 5 : i32
    %195 = vector.broadcast %c5_i32 : i32 to vector<64x1xi32>
    %196 = arith.addi %38, %195 : vector<64x1xi32>
    %c0_i32_76 = arith.constant 0 : i32
    %197 = vector.broadcast %c0_i32_76 : i32 to vector<64x1xi32>
    %198 = arith.cmpi sge, %196, %197 : vector<64x1xi32>
    %c32_i32_77 = arith.constant 32 : i32
    %199 = vector.broadcast %c32_i32_77 : i32 to vector<64x1xi32>
    %200 = arith.cmpi slt, %196, %199 : vector<64x1xi32>
    %201 = arith.andi %198, %200 : vector<64x1xi1>
    %c13 = arith.constant 13 : index
    %c0_78 = arith.constant 0 : index
    %202 = vector.load %arg7[%c13, %c0_78] : memref<80x16xf32, #tpu.memory_space<vmem>>, vector<64x16xf32>
    %cst_79 = arith.constant 0.000000e+00 : f32
    %203 = vector.shape_cast %201 : vector<64x1xi1> to vector<64x1xi1>
    %204 = vector.broadcast %203 : vector<64x1xi1> to vector<64x16xi1>
    %205 = vector.broadcast %cst_79 : f32 to vector<64x16xf32>
    %206 = arith.select %204, %202, %205 : vector<64x16xi1>, vector<64x16xf32>
    %c6_i32 = arith.constant 6 : i32
    %207 = vector.broadcast %c6_i32 : i32 to vector<64x1xi32>
    %208 = arith.addi %38, %207 : vector<64x1xi32>
    %c0_i32_80 = arith.constant 0 : i32
    %209 = vector.broadcast %c0_i32_80 : i32 to vector<64x1xi32>
    %210 = arith.cmpi sge, %208, %209 : vector<64x1xi32>
    %c32_i32_81 = arith.constant 32 : i32
    %211 = vector.broadcast %c32_i32_81 : i32 to vector<64x1xi32>
    %212 = arith.cmpi slt, %208, %211 : vector<64x1xi32>
    %213 = arith.andi %210, %212 : vector<64x1xi1>
    %c14 = arith.constant 14 : index
    %c0_82 = arith.constant 0 : index
    %214 = vector.load %arg7[%c14, %c0_82] : memref<80x16xf32, #tpu.memory_space<vmem>>, vector<64x16xf32>
    %cst_83 = arith.constant 0.000000e+00 : f32
    %215 = vector.shape_cast %213 : vector<64x1xi1> to vector<64x1xi1>
    %216 = vector.broadcast %215 : vector<64x1xi1> to vector<64x16xi1>
    %217 = vector.broadcast %cst_83 : f32 to vector<64x16xf32>
    %218 = arith.select %216, %214, %217 : vector<64x16xi1>, vector<64x16xf32>
    %c7_i32 = arith.constant 7 : i32
    %219 = vector.broadcast %c7_i32 : i32 to vector<64x1xi32>
    %220 = arith.addi %38, %219 : vector<64x1xi32>
    %c0_i32_84 = arith.constant 0 : i32
    %221 = vector.broadcast %c0_i32_84 : i32 to vector<64x1xi32>
    %222 = arith.cmpi sge, %220, %221 : vector<64x1xi32>
    %c32_i32_85 = arith.constant 32 : i32
    %223 = vector.broadcast %c32_i32_85 : i32 to vector<64x1xi32>
    %224 = arith.cmpi slt, %220, %223 : vector<64x1xi32>
    %225 = arith.andi %222, %224 : vector<64x1xi1>
    %c15 = arith.constant 15 : index
    %c0_86 = arith.constant 0 : index
    %226 = vector.load %arg7[%c15, %c0_86] : memref<80x16xf32, #tpu.memory_space<vmem>>, vector<64x16xf32>
    %cst_87 = arith.constant 0.000000e+00 : f32
    %227 = vector.shape_cast %225 : vector<64x1xi1> to vector<64x1xi1>
    %228 = vector.broadcast %227 : vector<64x1xi1> to vector<64x16xi1>
    %229 = vector.broadcast %cst_87 : f32 to vector<64x16xf32>
    %230 = arith.select %228, %226, %229 : vector<64x16xi1>, vector<64x16xf32>
    %c8_i32 = arith.constant 8 : i32
    %231 = vector.broadcast %c8_i32 : i32 to vector<64x1xi32>
    %232 = arith.addi %38, %231 : vector<64x1xi32>
    %c0_i32_88 = arith.constant 0 : i32
    %233 = vector.broadcast %c0_i32_88 : i32 to vector<64x1xi32>
    %234 = arith.cmpi sge, %232, %233 : vector<64x1xi32>
    %c32_i32_89 = arith.constant 32 : i32
    %235 = vector.broadcast %c32_i32_89 : i32 to vector<64x1xi32>
    %236 = arith.cmpi slt, %232, %235 : vector<64x1xi32>
    %237 = arith.andi %234, %236 : vector<64x1xi1>
    %c16 = arith.constant 16 : index
    %c0_90 = arith.constant 0 : index
    %238 = vector.load %arg7[%c16, %c0_90] : memref<80x16xf32, #tpu.memory_space<vmem>>, vector<64x16xf32>
    %cst_91 = arith.constant 0.000000e+00 : f32
    %239 = vector.shape_cast %237 : vector<64x1xi1> to vector<64x1xi1>
    %240 = vector.broadcast %239 : vector<64x1xi1> to vector<64x16xi1>
    %241 = vector.broadcast %cst_91 : f32 to vector<64x16xf32>
    %242 = arith.select %240, %238, %241 : vector<64x16xi1>, vector<64x16xf32>
    %243 = tpu.concatenate %50, %62, %74, %86, %98, %110, %122, %134, %146, %158, %170, %182, %194, %206, %218, %230 in 1 : vector<64x16xf32>, vector<64x16xf32>, vector<64x16xf32>, vector<64x16xf32>, vector<64x16xf32>, vector<64x16xf32>, vector<64x16xf32>, vector<64x16xf32>, vector<64x16xf32>, vector<64x16xf32>, vector<64x16xf32>, vector<64x16xf32>, vector<64x16xf32>, vector<64x16xf32>, vector<64x16xf32>, vector<64x16xf32> -> vector<64x256xf32>
    %244 = tpu.concatenate %243, %242 in 1 : vector<64x256xf32>, vector<64x16xf32> -> vector<64x272xf32>
    %245 = arith.truncf %244 : vector<64x272xf32> to vector<64x272xbf16>
    %c0_92 = arith.constant 0 : index
    %c0_93 = arith.constant 0 : index
    %246 = vector.load %arg3[%c0_92, %c0_93] : memref<272x100xbf16, #tpu.memory_space<vmem>>, vector<272x100xbf16>
    %cst_94 = arith.constant dense<0.000000e+00> : vector<64x100xf32>
    %247 = tpu.matmul %245, %246, %cst_94 {dimension_numbers = #tpu.dot_dimension_numbers<[1], [0], [0], [1], [0, 0, 1, 1], [], []>} : vector<64x272xbf16>, vector<272x100xbf16>, vector<64x100xf32> -> vector<64x100xf32>
    %248 = vector.broadcast %2 : vector<1x100xf32> to vector<64x100xf32>
    %249 = arith.addf %247, %248 : vector<64x100xf32>
    %cst_95 = arith.constant 0.000000e+00 : f32
    %250 = vector.broadcast %cst_95 : f32 to vector<64x100xf32>
    %251 = arith.maximumf %249, %250 : vector<64x100xf32>
    %252 = tpu.iota {dimensions = array<i32: 0>} : vector<2x64xi32>
    %253 = tpu.iota {dimensions = array<i32: 1>} : vector<2x64xi32>
    %c32_i32_96 = arith.constant 32 : i32
    %254 = vector.broadcast %c32_i32_96 : i32 to vector<2x64xi32>
    %255 = arith.muli %252, %254 : vector<2x64xi32>
    %256 = arith.cmpi sge, %253, %255 : vector<2x64xi32>
    %c32_i32_97 = arith.constant 32 : i32
    %257 = vector.broadcast %c32_i32_97 : i32 to vector<2x64xi32>
    %258 = arith.addi %255, %257 : vector<2x64xi32>
    %259 = arith.cmpi slt, %253, %258 : vector<2x64xi32>
    %260 = arith.andi %256, %259 : vector<2x64xi1>
    %cst_98 = arith.constant 3.125000e-02 : f32
    %cst_99 = arith.constant 0.000000e+00 : f32
    %261 = vector.broadcast %cst_98 : f32 to vector<2x64xf32>
    %262 = vector.broadcast %cst_99 : f32 to vector<2x64xf32>
    %263 = arith.select %260, %261, %262 : vector<2x64xi1>, vector<2x64xf32>
    %cst_100 = arith.constant dense<0.000000e+00> : vector<2x100xf32>
    %264 = tpu.matmul %263, %251, %cst_100 {dimension_numbers = #tpu.dot_dimension_numbers<[1], [0], [0], [1], [0, 0, 1, 1], [], []>} : vector<2x64xf32>, vector<64x100xf32>, vector<2x100xf32> -> vector<2x100xf32>
    %265 = arith.truncf %264 : vector<2x100xf32> to vector<2x100xbf16>
    %c0_101 = arith.constant 0 : index
    %c0_102 = arith.constant 0 : index
    %266 = vector.load %arg4[%c0_101, %c0_102] : memref<100x100xbf16, #tpu.memory_space<vmem>>, vector<100x100xbf16>
    %cst_103 = arith.constant dense<0.000000e+00> : vector<2x100xf32>
    %267 = tpu.matmul %265, %266, %cst_103 {dimension_numbers = #tpu.dot_dimension_numbers<[1], [0], [0], [1], [0, 0, 1, 1], [], []>} : vector<2x100xbf16>, vector<100x100xbf16>, vector<2x100xf32> -> vector<2x100xf32>
    %268 = vector.broadcast %3 : vector<1x100xf32> to vector<2x100xf32>
    %269 = arith.addf %267, %268 : vector<2x100xf32>
    %cst_104 = arith.constant 0.000000e+00 : f32
    %270 = vector.broadcast %cst_104 : f32 to vector<2x100xf32>
    %271 = arith.subf %270, %269 : vector<2x100xf32>
    %272 = math.exp %271 : vector<2x100xf32>
    %cst_105 = arith.constant 1.000000e+00 : f32
    %273 = vector.broadcast %cst_105 : f32 to vector<2x100xf32>
    %274 = arith.addf %273, %272 : vector<2x100xf32>
    %275 = tpu.reciprocal %274 {approx = true} : vector<2x100xf32> -> vector<2x100xf32>
    %276 = arith.truncf %275 : vector<2x100xf32> to vector<2x100xbf16>
    %c0_106 = arith.constant 0 : index
    %c0_107 = arith.constant 0 : index
    %277 = vector.load %arg5[%c0_106, %c0_107] : memref<100x128xbf16, #tpu.memory_space<vmem>>, vector<100x128xbf16>
    %cst_108 = arith.constant dense<0.000000e+00> : vector<2x128xf32>
    %278 = tpu.matmul %276, %277, %cst_108 {dimension_numbers = #tpu.dot_dimension_numbers<[1], [0], [0], [1], [0, 0, 1, 1], [], []>} : vector<2x100xbf16>, vector<100x128xbf16>, vector<2x128xf32> -> vector<2x128xf32>
    %279 = vector.broadcast %4 : vector<1x128xf32> to vector<2x128xf32>
    %280 = arith.addf %278, %279 : vector<2x128xf32>
    %c0_109 = arith.constant 0 : index
    %c0_110 = arith.constant 0 : index
    %281 = vector.load %arg6[%c0_109, %c0_110] : memref<2x128xf32, #tpu.memory_space<vmem>>, vector<2x128xf32>
    tpu.vector_store %arg6[%c0_109, %c0_110], %280 {strides = array<i32>} : memref<2x128xf32, #tpu.memory_space<vmem>>, vector<2x128xf32>,
    return
  }
  func.func @transform_0(%arg0: i32) -> (i32, i32) {
    %c0_i32 = arith.constant 0 : i32
    %c0_i32_0 = arith.constant 0 : i32
    return %arg0, %c0_i32 : i32, i32
  }
  func.func @transform_1(%arg0: i32) -> (i32, i32) {
    %c0_i32 = arith.constant 0 : i32
    %c0_i32_0 = arith.constant 0 : i32
    %c0_i32_1 = arith.constant 0 : i32
    return %c0_i32, %c0_i32_0 : i32, i32
  }
  func.func @transform_2(%arg0: i32) -> (i32, i32) {
    %c0_i32 = arith.constant 0 : i32
    %c0_i32_0 = arith.constant 0 : i32
    %c0_i32_1 = arith.constant 0 : i32
    return %c0_i32, %c0_i32_0 : i32, i32
  }
  func.func @transform_3(%arg0: i32) -> (i32, i32) {
    %c0_i32 = arith.constant 0 : i32
    %c0_i32_0 = arith.constant 0 : i32
    %c0_i32_1 = arith.constant 0 : i32
    return %c0_i32, %c0_i32_0 : i32, i32
  }
  func.func @transform_4(%arg0: i32) -> (i32, i32) {
    %c0_i32 = arith.constant 0 : i32
    %c0_i32_0 = arith.constant 0 : i32
    %c0_i32_1 = arith.constant 0 : i32
    return %c0_i32, %c0_i32_0 : i32, i32
  }
  func.func @transform_5(%arg0: i32) -> (i32, i32) {
    %c0_i32 = arith.constant 0 : i32
    %c0_i32_0 = arith.constant 0 : i32
    return %arg0, %c0_i32 : i32, i32
  }
}

</mosaic_0001>

<llo_original>
// kernel: cnn_baseline_forward.1
$region0: #{cnn_baseline_forward.1}
  #allocation0 [shape = 'u32[]', space=smem, size = 0x4, offset = 0x4, fixed_abs, tag = 'smem constant byte address 0x4 - core index']
  #allocation1 [shape = 'u32[144,128]{1,0:T(1,128)}', space=vmem, size = 0x12000, scoped, tag = 'internal scratch']
  #allocation2 [shape = 'f32[80,16]{1,0:T(8,128)}', space=vmem, size = 0xa000, scoped, tag = 'scratch operand']
  %s0 = inlined_call_operand.vmem [shape: f32[64,16], index: 0, kind: input, shape index: {}]
  %s1 = inlined_call_operand.hbm [shape: f32[8,128], index: 1, kind: input, shape index: {}]
  %s2 = inlined_call_operand.hbm [shape: bf16[272,100], index: 2, kind: input, shape index: {}]
  %s3 = inlined_call_operand.vmem [shape: bf16[100,100], index: 3, kind: input, shape index: {}]
  %s4 = inlined_call_operand.vmem [shape: bf16[100,128], index: 4, kind: input, shape index: {}]
  %s5 = inlined_call_operand.hbm [shape: f32[2,128], index: 5, kind: output, shape index: {}]
  %s6 = sld [smem:[#allocation0]]
  $region38: #{cnn_baseline_forward.1} parent=0
    _
  %s8 = ssub.s32 1, %s6
  %s9 = scalar_select 0, %s8, %s6
  $region1: #{cnn_baseline_forward.1} parent=0
    #allocation3 [shape = 'u8[4096]{0}', space=vmem, size = 0x1000, scoped, tag = 'input window, operand 1, single buffered']
    #allocation4 [shape = 's32[1]{0}', space=sflag, size = 0x4, scoped, tag = 'scoped memory for cnn_baseline_forward.1']
    #allocation5 [shape = 's32[1]{0}', space=sflag, size = 0x4, scoped, tag = 'scoped memory for cnn_baseline_forward.1']
    #allocation6 [shape = 'u8[69632]{0}', space=vmem, size = 0x11000, scoped, tag = 'input window, operand 2, single buffered']
    #allocation7 [shape = 's32[1]{0}', space=sflag, size = 0x4, scoped, tag = 'scoped memory for cnn_baseline_forward.1']
    #allocation8 [shape = 'u8[1024]{0}', space=vmem, size = 0x400, scoped, tag = 'output window, operand 0, single buffered']
    %10 = vsyncpa [#allocation4], 0
    %11 = vsyncpa [#allocation7], 0
    %12 = vsyncpa [#allocation5], 0
    // Predicated region
    $region2: #{cnn_baseline_forward.1} parent=1 // pred_check
      _
    $region3: #{cnn_baseline_forward.1} parent=1 // pred_check_branch
      %14 = sbr.rel (0) target = $region5
    $region4: #{cnn_baseline_forward.1} parent=1 // pred_region
      _
    $region5: #{cnn_baseline_forward.1} parent=1 // pred_fallthru
      _
    // Predicated region
    $region6: #{cnn_baseline_forward.1} parent=1 // pred_check
      _
    $region7: #{cnn_baseline_forward.1} parent=1 // pred_check_branch
      %16 = sbr.rel (0) target = $region9
    $region8: #{cnn_baseline_forward.1} parent=1 // pred_region
      %s18 = ssub.s32 128, 128
      %19 = vsyncadd [#allocation4], %s18
      %s21 = sshll.u32 [#allocation3], 4
      %s22 = int_to_ptr.vmem [resolvable:$true] %s21
      %24 = dma.hbm_to_vmem [thread:$0]  %s1, 128, %s22, [#allocation4]
    $region9: #{cnn_baseline_forward.1} parent=1 // pred_fallthru
      _
    // Predicated region
    $region10: #{cnn_baseline_forward.1} parent=1 // pred_check
      _
    $region11: #{cnn_baseline_forward.1} parent=1 // pred_check_branch
      %26 = sbr.rel (0) target = $region13
    $region12: #{cnn_baseline_forward.1} parent=1 // pred_region
      %s28 = ssub.s32 2176, 2176
      %29 = vsyncadd [#allocation7], %s28
      %s30 = sshll.u32 [#allocation6], 4
      %s31 = int_to_ptr.vmem [resolvable:$true] %s30
      %36 = dma.hbm_to_vmem [thread:$0]  %s2, 2176, %s31, [#allocation7], 64, 64, 4
    $region13: #{cnn_baseline_forward.1} parent=1 // pred_fallthru
      _
    // Predicated region
    $region14: #{cnn_baseline_forward.1} parent=1 // pred_check
      _
    $region15: #{cnn_baseline_forward.1} parent=1 // pred_check_branch
      %38 = sbr.rel (0) target = $region17
    $region16: #{cnn_baseline_forward.1} parent=1 // pred_region
      _
    $region17: #{cnn_baseline_forward.1} parent=1 // pred_fallthru
      _
    // Predicated region
    $region18: #{cnn_baseline_forward.1} parent=1 // pred_check
      _
    $region19: #{cnn_baseline_forward.1} parent=1 // pred_check_branch
      %40 = sbr.rel (0) target = $region21
    $region20: #{cnn_baseline_forward.1} parent=1 // pred_region
      _
    $region21: #{cnn_baseline_forward.1} parent=1 // pred_fallthru
      _
    // Predicated region
    $region22: #{cnn_baseline_forward.1} parent=1 // pred_check
      _
    $region23: #{cnn_baseline_forward.1} parent=1 // pred_check_branch
      %42 = sbr.rel (0) target = $region25
    $region24: #{cnn_baseline_forward.1} parent=1 // pred_region
      %43 = dma.done [#allocation4], 128
    $region25: #{cnn_baseline_forward.1} parent=1 // pred_fallthru
      _
    // Predicated region
    $region26: #{cnn_baseline_forward.1} parent=1 // pred_check
      _
    $region27: #{cnn_baseline_forward.1} parent=1 // pred_check_branch
      %45 = sbr.rel (0) target = $region29
    $region28: #{cnn_baseline_forward.1} parent=1 // pred_region
      %46 = dma.done [#allocation7], 2176
    $region29: #{cnn_baseline_forward.1} parent=1 // pred_fallthru
      _
    %v48 = vld [vmem:[#allocation3] sm:$0x1]
    %v49 = vld [vmem:[#allocation3 + $0x1] sm:$0x1]
    %v50 = vld [vmem:[#allocation3 + $0x2] sm:$0x1]
    %v51 = vld [vmem:[#allocation3 + $0x3] sm:$0x1]
    %v52 = vld [vmem:[#allocation3 + $0x4] sm:$0x1]
    %v53 = vld [vmem:[%s0] sm:$0xff]
    %v54 = vld [vmem:[%s0 + $0x8] sm:$0xff]
    %v55 = vld [vmem:[%s0 + $0x10] sm:$0xff]
    %v56 = vld [vmem:[%s0 + $0x18] sm:$0xff]
    %v57 = vld [vmem:[%s0 + $0x20] sm:$0xff]
    %v58 = vld [vmem:[%s0 + $0x28] sm:$0xff]
    %v59 = vld [vmem:[%s0 + $0x30] sm:$0xff]
    %v60 = vld [vmem:[%s0 + $0x38] sm:$0xff]
    %vm61 = vcmask 130048
    %v62 = vsel %vm61, %v53, 0.0
    %63 = vadd.xlane.f32.xlu0 %v62
    %v64 = vpop.xlane.xlu0 %63
    %v65 = vsel %vm61, %v54, 0.0
    %66 = vadd.xlane.f32.xlu0 %v65
    %v67 = vpop.xlane.xlu0 %66
    %v68 = vsel %vm61, %v55, 0.0
    %69 = vadd.xlane.f32.xlu0 %v68
    %v70 = vpop.xlane.xlu0 %69
    %v71 = vsel %vm61, %v56, 0.0
    %72 = vadd.xlane.f32.xlu0 %v71
    %v73 = vpop.xlane.xlu0 %72
    %v74 = vsel %vm61, %v57, 0.0
    %75 = vadd.xlane.f32.xlu0 %v74
    %v76 = vpop.xlane.xlu0 %75
    %v77 = vsel %vm61, %v58, 0.0
    %78 = vadd.xlane.f32.xlu0 %v77
    %v79 = vpop.xlane.xlu0 %78
    %v80 = vsel %vm61, %v59, 0.0
    %81 = vadd.xlane.f32.xlu0 %v80
    %v82 = vpop.xlane.xlu0 %81
    %v83 = vsel %vm61, %v60, 0.0
    %84 = vadd.xlane.f32.xlu0 %v83
    %v85 = vpop.xlane.xlu0 %84
    %v86 = vrcp.pop 16.0
    %v87 = vmul.f32 %v64, %v86
    %v88 = vmul.f32 %v67, %v86
    %v89 = vmul.f32 %v70, %v86
    %v90 = vmul.f32 %v73, %v86
    %v91 = vmul.f32 %v76, %v86
    %v92 = vmul.f32 %v79, %v86
    %v93 = vmul.f32 %v82, %v86
    %v94 = vmul.f32 %v85, %v86
    %v95 = vsub.f32 %v53, %v87
    %v96 = vsub.f32 %v54, %v88
    %v97 = vsub.f32 %v55, %v89
    %v98 = vsub.f32 %v56, %v90
    %v99 = vsub.f32 %v57, %v91
    %v100 = vsub.f32 %v58, %v92
    %v101 = vsub.f32 %v59, %v93
    %v102 = vsub.f32 %v60, %v94
    %v103 = vmul.f32 %v95, %v95
    %v104 = vmul.f32 %v96, %v96
    %v105 = vmul.f32 %v97, %v97
    %v106 = vmul.f32 %v98, %v98
    %v107 = vmul.f32 %v99, %v99
    %v108 = vmul.f32 %v100, %v100
    %v109 = vmul.f32 %v101, %v101
    %v110 = vmul.f32 %v102, %v102
    %v111 = vsel %vm61, %v103, 0.0
    %112 = vadd.xlane.f32.xlu0 %v111
    %v113 = vpop.xlane.xlu0 %112
    %v114 = vsel %vm61, %v104, 0.0
    %115 = vadd.xlane.f32.xlu0 %v114
    %v116 = vpop.xlane.xlu0 %115
    %v117 = vsel %vm61, %v105, 0.0
    %118 = vadd.xlane.f32.xlu0 %v117
    %v119 = vpop.xlane.xlu0 %118
    %v120 = vsel %vm61, %v106, 0.0
    %121 = vadd.xlane.f32.xlu0 %v120
    %v122 = vpop.xlane.xlu0 %121
    %v123 = vsel %vm61, %v107, 0.0
    %124 = vadd.xlane.f32.xlu0 %v123
    %v125 = vpop.xlane.xlu0 %124
    %v126 = vsel %vm61, %v108, 0.0
    %127 = vadd.xlane.f32.xlu0 %v126
    %v128 = vpop.xlane.xlu0 %127
    %v129 = vsel %vm61, %v109, 0.0
    %130 = vadd.xlane.f32.xlu0 %v129
    %v131 = vpop.xlane.xlu0 %130
    %v132 = vsel %vm61, %v110, 0.0
    %133 = vadd.xlane.f32.xlu0 %v132
    %v134 = vpop.xlane.xlu0 %133
    %v135 = vmul.f32 %v113, %v86
    %v136 = vmul.f32 %v116, %v86
    %v137 = vmul.f32 %v119, %v86
    %v138 = vmul.f32 %v122, %v86
    %v139 = vmul.f32 %v125, %v86
    %v140 = vmul.f32 %v128, %v86
    %v141 = vmul.f32 %v131, %v86
    %v142 = vmul.f32 %v134, %v86
    %v143 = vadd.f32 %v135, 1e-05
    %v144 = vadd.f32 %v136, 1e-05
    %v145 = vadd.f32 %v137, 1e-05
    %v146 = vadd.f32 %v138, 1e-05
    %v147 = vadd.f32 %v139, 1e-05
    %v148 = vadd.f32 %v140, 1e-05
    %v149 = vadd.f32 %v141, 1e-05
    %v150 = vadd.f32 %v142, 1e-05
    %v151 = vrsqrt.pop %v143
    %v152 = vrsqrt.pop %v144
    %v153 = vrsqrt.pop %v145
    %v154 = vrsqrt.pop %v146
    %v155 = vrsqrt.pop %v147
    %v156 = vrsqrt.pop %v148
    %v157 = vrsqrt.pop %v149
    %v158 = vrsqrt.pop %v150
    %v159 = vmul.f32 %v95, %v151
    %v160 = vmul.f32 %v96, %v152
    %v161 = vmul.f32 %v97, %v153
    %v162 = vmul.f32 %v98, %v154
    %v163 = vmul.f32 %v99, %v155
    %v164 = vmul.f32 %v100, %v156
    %v165 = vmul.f32 %v101, %v157
    %v166 = vmul.f32 %v102, %v158
    %v167 = vlaneseq
    %v168 = vshrl.u32 %v167, 7
    %v169 = vsub.s32 0, %v168
    %v170 = vrot.slane %v48, %v169
    %v171 = vmul.f32 %v159, %v170
    %v172 = vmul.f32 %v160, %v170
    %v173 = vmul.f32 %v161, %v170
    %v174 = vmul.f32 %v162, %v170
    %v175 = vmul.f32 %v163, %v170
    %v176 = vmul.f32 %v164, %v170
    %v177 = vmul.f32 %v165, %v170
    %v178 = vmul.f32 %v166, %v170
    %v179 = vlaneseq
    %v180 = vshrl.u32 %v179, 7
    %v181 = vsub.s32 0, %v180
    %v182 = vrot.slane %v49, %v181
    %v183 = vadd.f32 %v171, %v182
    %v184 = vadd.f32 %v172, %v182
    %v185 = vadd.f32 %v173, %v182
    %v186 = vadd.f32 %v174, %v182
    %v187 = vadd.f32 %v175, %v182
    %v188 = vadd.f32 %v176, %v182
    %v189 = vadd.f32 %v177, %v182
    %v190 = vadd.f32 %v178, %v182
    %191 = vst.msk [vmem:[#allocation2] sm:$0xff] %vm61, 0.0
    %192 = vst.msk [vmem:[#allocation2 + $0x48] sm:$0xff] %vm61, 0.0
    %193 = vst.msk [vmem:[#allocation2 + $0x8] sm:$0xff] %vm61, %v183
    %194 = vst.msk [vmem:[#allocation2 + $0x10] sm:$0xff] %vm61, %v184
    %195 = vst.msk [vmem:[#allocation2 + $0x18] sm:$0xff] %vm61, %v185
    %196 = vst.msk [vmem:[#allocation2 + $0x20] sm:$0xff] %vm61, %v186
    %197 = vst.msk [vmem:[#allocation2 + $0x28] sm:$0xff] %vm61, %v187
    %198 = vst.msk [vmem:[#allocation2 + $0x30] sm:$0xff] %vm61, %v188
    %199 = vst.msk [vmem:[#allocation2 + $0x38] sm:$0xff] %vm61, %v189
    %200 = vst.msk [vmem:[#allocation2 + $0x40] sm:$0xff] %vm61, %v190
    %v201 = vlaneseq
    %v202 = vshrl.u32 %v201, 7
    %v203 = vadd.s32 %v202, 8
    %v204 = vadd.s32 %v202, 16
    %v205 = vadd.s32 %v202, 24
    %v206 = vadd.s32 %v202, 32
    %v207 = vadd.s32 %v202, 40
    %v208 = vadd.s32 %v202, 48
    %v209 = vadd.s32 %v202, 56
    %vm210 = vcmp.ge.s32.totalorder %v202, 32
    %vm211 = vcmp.ge.s32.totalorder %v203, 32
    %vm212 = vcmp.ge.s32.totalorder %v204, 32
    %vm213 = vcmp.ge.s32.totalorder %v205, 32
    %vm214 = vcmp.ge.s32.totalorder %v206, 32
    %vm215 = vcmp.ge.s32.totalorder %v207, 32
    %vm216 = vcmp.ge.s32.totalorder %v208, 32
    %vm217 = vcmp.ge.s32.totalorder %v209, 32
    %v218 = vsub.s32 %v202, 32
    %v219 = vsub.s32 %v203, 32
    %v220 = vsub.s32 %v204, 32
    %v221 = vsub.s32 %v205, 32
    %v222 = vsub.s32 %v207, 32
    %v223 = vsub.s32 %v208, 32
    %v224 = vsub.s32 %v209, 32
    %v225 = vsel %vm210, %v218, %v202
    %v226 = vsel %vm211, %v219, %v203
    %v227 = vsel %vm212, %v220, %v204
    %v228 = vsel %vm213, %v221, %v205
    %v229 = vsel %vm214, %v202, %v206
    %v230 = vsel %vm215, %v222, %v207
    %v231 = vsel %vm216, %v223, %v208
    %v232 = vsel %vm217, %v224, %v209
    %v233 = vadd.s32 %v225, 4294967288
    %v234 = vadd.s32 %v226, 4294967288
    %v235 = vadd.s32 %v227, 4294967288
    %v236 = vadd.s32 %v228, 4294967288
    %v237 = vadd.s32 %v229, 4294967288
    %v238 = vadd.s32 %v230, 4294967288
    %v239 = vadd.s32 %v231, 4294967288
    %v240 = vadd.s32 %v232, 4294967288
    %vm241 = vcmp.ge.s32.totalorder %v233, 0
    %vm242 = vcmp.ge.s32.totalorder %v234, 0
    %vm243 = vcmp.ge.s32.totalorder %v235, 0
    %vm244 = vcmp.ge.s32.totalorder %v236, 0
    %vm245 = vcmp.ge.s32.totalorder %v237, 0
    %vm246 = vcmp.ge.s32.totalorder %v238, 0
    %vm247 = vcmp.ge.s32.totalorder %v239, 0
    %vm248 = vcmp.ge.s32.totalorder %v240, 0
    %vm249 = vcmp.lt.s32.totalorder %v233, 32
    %vm250 = vcmp.lt.s32.totalorder %v234, 32
    %vm251 = vcmp.lt.s32.totalorder %v235, 32
    %vm252 = vcmp.lt.s32.totalorder %v236, 32
    %vm253 = vcmp.lt.s32.totalorder %v237, 32
    %vm254 = vcmp.lt.s32.totalorder %v238, 32
    %vm255 = vcmp.lt.s32.totalorder %v239, 32
    %vm256 = vcmp.lt.s32.totalorder %v240, 32
    %vm257 = vmand %vm241, %vm249
    %vm258 = vmand %vm242, %vm250
    %vm259 = vmand %vm243, %vm251
    %vm260 = vmand %vm244, %vm252
    %vm261 = vmand %vm245, %vm253
    %vm262 = vmand %vm246, %vm254
    %vm263 = vmand %vm247, %vm255
    %vm264 = vmand %vm248, %vm256
    %v265 = vld [vmem:[#allocation2] sm:$0xff]
    %v266 = vld [vmem:[#allocation2 + $0x8] sm:$0xff]
    %v267 = vld [vmem:[#allocation2 + $0x10] sm:$0xff]
    %v268 = vld [vmem:[#allocation2 + $0x18] sm:$0xff]
    %v269 = vld [vmem:[#allocation2 + $0x20] sm:$0xff]
    %v270 = vld [vmem:[#allocation2 + $0x28] sm:$0xff]
    %v271 = vld [vmem:[#allocation2 + $0x30] sm:$0xff]
    %v272 = vld [vmem:[#allocation2 + $0x38] sm:$0xff]
    %v273 = vsel %vm257, 1, 0
    %v274 = vsel %vm258, 1, 0
    %v275 = vsel %vm259, 1, 0
    %v276 = vsel %vm260, 1, 0
    %v277 = vsel %vm261, 1, 0
    %v278 = vsel %vm262, 1, 0
    %v279 = vsel %vm263, 1, 0
    %v280 = vsel %vm264, 1, 0
    %vm281 = vcmp.eq.s32.totalorder %v273, 1
    %vm282 = vcmp.eq.s32.totalorder %v274, 1
    %vm283 = vcmp.eq.s32.totalorder %v275, 1
    %vm284 = vcmp.eq.s32.totalorder %v276, 1
    %vm285 = vcmp.eq.s32.totalorder %v277, 1
    %vm286 = vcmp.eq.s32.totalorder %v278, 1
    %vm287 = vcmp.eq.s32.totalorder %v279, 1
    %vm288 = vcmp.eq.s32.totalorder %v280, 1
    %v289 = vsel %vm281, %v265, 0.0
    %v290 = vsel %vm282, %v266, 0.0
    %v291 = vsel %vm283, %v267, 0.0
    %v292 = vsel %vm284, %v268, 0.0
    %v293 = vsel %vm285, %v269, 0.0
    %v294 = vsel %vm286, %v270, 0.0
    %v295 = vsel %vm287, %v271, 0.0
    %v296 = vsel %vm288, %v272, 0.0
    %v297 = vadd.s32 %v225, 4294967289
    %v298 = vadd.s32 %v226, 4294967289
    %v299 = vadd.s32 %v227, 4294967289
    %v300 = vadd.s32 %v228, 4294967289
    %v301 = vadd.s32 %v229, 4294967289
    %v302 = vadd.s32 %v230, 4294967289
    %v303 = vadd.s32 %v231, 4294967289
    %v304 = vadd.s32 %v232, 4294967289
    %vm305 = vcmp.ge.s32.totalorder %v297, 0
    %vm306 = vcmp.ge.s32.totalorder %v298, 0
    %vm307 = vcmp.ge.s32.totalorder %v299, 0
    %vm308 = vcmp.ge.s32.totalorder %v300, 0
    %vm309 = vcmp.ge.s32.totalorder %v301, 0
    %vm310 = vcmp.ge.s32.totalorder %v302, 0
    %vm311 = vcmp.ge.s32.totalorder %v303, 0
    %vm312 = vcmp.ge.s32.totalorder %v304, 0
    %vm313 = vcmp.lt.s32.totalorder %v297, 32
    %vm314 = vcmp.lt.s32.totalorder %v298, 32
    %vm315 = vcmp.lt.s32.totalorder %v299, 32
    %vm316 = vcmp.lt.s32.totalorder %v300, 32
    %vm317 = vcmp.lt.s32.totalorder %v301, 32
    %vm318 = vcmp.lt.s32.totalorder %v302, 32
    %vm319 = vcmp.lt.s32.totalorder %v303, 32
    %vm320 = vcmp.lt.s32.totalorder %v304, 32
    %vm321 = vmand %vm305, %vm313
    %vm322 = vmand %vm306, %vm314
    %vm323 = vmand %vm307, %vm315
    %vm324 = vmand %vm308, %vm316
    %vm325 = vmand %vm309, %vm317
    %vm326 = vmand %vm310, %vm318
    %vm327 = vmand %vm311, %vm319
    %vm328 = vmand %vm312, %vm320
    %v329 = vld [vmem:[#allocation2 + $0x1] sm:$0xff]
    %v330 = vld [vmem:[#allocation2 + $0x9] sm:$0xff]
    %v331 = vld [vmem:[#allocation2 + $0x11] sm:$0xff]
    %v332 = vld [vmem:[#allocation2 + $0x19] sm:$0xff]
    %v333 = vld [vmem:[#allocation2 + $0x21] sm:$0xff]
    %v334 = vld [vmem:[#allocation2 + $0x29] sm:$0xff]
    %v335 = vld [vmem:[#allocation2 + $0x31] sm:$0xff]
    %v336 = vld [vmem:[#allocation2 + $0x39] sm:$0xff]
    %v337 = vsel %vm321, 1, 0
    %v338 = vsel %vm322, 1, 0
    %v339 = vsel %vm323, 1, 0
    %v340 = vsel %vm324, 1, 0
    %v341 = vsel %vm325, 1, 0
    %v342 = vsel %vm326, 1, 0
    %v343 = vsel %vm327, 1, 0
    %v344 = vsel %vm328, 1, 0
    %vm345 = vcmp.eq.s32.totalorder %v337, 1
    %vm346 = vcmp.eq.s32.totalorder %v338, 1
    %vm347 = vcmp.eq.s32.totalorder %v339, 1
    %vm348 = vcmp.eq.s32.totalorder %v340, 1
    %vm349 = vcmp.eq.s32.totalorder %v341, 1
    %vm350 = vcmp.eq.s32.totalorder %v342, 1
    %vm351 = vcmp.eq.s32.totalorder %v343, 1
    %vm352 = vcmp.eq.s32.totalorder %v344, 1
    %v353 = vsel %vm345, %v329, 0.0
    %v354 = vsel %vm346, %v330, 0.0
    %v355 = vsel %vm347, %v331, 0.0
    %v356 = vsel %vm348, %v332, 0.0
    %v357 = vsel %vm349, %v333, 0.0
    %v358 = vsel %vm350, %v334, 0.0
    %v359 = vsel %vm351, %v335, 0.0
    %v360 = vsel %vm352, %v336, 0.0
    %v361 = vadd.s32 %v225, 4294967290
    %v362 = vadd.s32 %v226, 4294967290
    %v363 = vadd.s32 %v227, 4294967290
    %v364 = vadd.s32 %v228, 4294967290
    %v365 = vadd.s32 %v229, 4294967290
    %v366 = vadd.s32 %v230, 4294967290
    %v367 = vadd.s32 %v231, 4294967290
    %v368 = vadd.s32 %v232, 4294967290
    %vm369 = vcmp.ge.s32.totalorder %v361, 0
    %vm370 = vcmp.ge.s32.totalorder %v362, 0
    %vm371 = vcmp.ge.s32.totalorder %v363, 0
    %vm372 = vcmp.ge.s32.totalorder %v364, 0
    %vm373 = vcmp.ge.s32.totalorder %v365, 0
    %vm374 = vcmp.ge.s32.totalorder %v366, 0
    %vm375 = vcmp.ge.s32.totalorder %v367, 0
    %vm376 = vcmp.ge.s32.totalorder %v368, 0
    %vm377 = vcmp.lt.s32.totalorder %v361, 32
    %vm378 = vcmp.lt.s32.totalorder %v362, 32
    %vm379 = vcmp.lt.s32.totalorder %v363, 32
    %vm380 = vcmp.lt.s32.totalorder %v364, 32
    %vm381 = vcmp.lt.s32.totalorder %v365, 32
    %vm382 = vcmp.lt.s32.totalorder %v366, 32
    %vm383 = vcmp.lt.s32.totalorder %v367, 32
    %vm384 = vcmp.lt.s32.totalorder %v368, 32
    %vm385 = vmand %vm369, %vm377
    %vm386 = vmand %vm370, %vm378
    %vm387 = vmand %vm371, %vm379
    %vm388 = vmand %vm372, %vm380
    %vm389 = vmand %vm373, %vm381
    %vm390 = vmand %vm374, %vm382
    %vm391 = vmand %vm375, %vm383
    %vm392 = vmand %vm376, %vm384
    %v393 = vld [vmem:[#allocation2 + $0x2] sm:$0xff]
    %v394 = vld [vmem:[#allocation2 + $0xa] sm:$0xff]
    %v395 = vld [vmem:[#allocation2 + $0x12] sm:$0xff]
    %v396 = vld [vmem:[#allocation2 + $0x1a] sm:$0xff]
    %v397 = vld [vmem:[#allocation2 + $0x22] sm:$0xff]
    %v398 = vld [vmem:[#allocation2 + $0x2a] sm:$0xff]
    %v399 = vld [vmem:[#allocation2 + $0x32] sm:$0xff]
    %v400 = vld [vmem:[#allocation2 + $0x3a] sm:$0xff]
    %v401 = vsel %vm385, 1, 0
    %v402 = vsel %vm386, 1, 0
    %v403 = vsel %vm387, 1, 0
    %v404 = vsel %vm388, 1, 0
    %v405 = vsel %vm389, 1, 0
    %v406 = vsel %vm390, 1, 0
    %v407 = vsel %vm391, 1, 0
    %v408 = vsel %vm392, 1, 0
    %vm409 = vcmp.eq.s32.totalorder %v401, 1
    %vm410 = vcmp.eq.s32.totalorder %v402, 1
    %vm411 = vcmp.eq.s32.totalorder %v403, 1
    %vm412 = vcmp.eq.s32.totalorder %v404, 1
    %vm413 = vcmp.eq.s32.totalorder %v405, 1
    %vm414 = vcmp.eq.s32.totalorder %v406, 1
    %vm415 = vcmp.eq.s32.totalorder %v407, 1
    %vm416 = vcmp.eq.s32.totalorder %v408, 1
    %v417 = vsel %vm409, %v393, 0.0
    %v418 = vsel %vm410, %v394, 0.0
    %v419 = vsel %vm411, %v395, 0.0
    %v420 = vsel %vm412, %v396, 0.0
    %v421 = vsel %vm413, %v397, 0.0
    %v422 = vsel %vm414, %v398, 0.0
    %v423 = vsel %vm415, %v399, 0.0
    %v424 = vsel %vm416, %v400, 0.0
    %v425 = vadd.s32 %v225, 4294967291
    %v426 = vadd.s32 %v226, 4294967291
    %v427 = vadd.s32 %v227, 4294967291
    %v428 = vadd.s32 %v228, 4294967291
    %v429 = vadd.s32 %v229, 4294967291
    %v430 = vadd.s32 %v230, 4294967291
    %v431 = vadd.s32 %v231, 4294967291
    %v432 = vadd.s32 %v232, 4294967291
    %vm433 = vcmp.ge.s32.totalorder %v425, 0
    %vm434 = vcmp.ge.s32.totalorder %v426, 0
    %vm435 = vcmp.ge.s32.totalorder %v427, 0
    %vm436 = vcmp.ge.s32.totalorder %v428, 0
    %vm437 = vcmp.ge.s32.totalorder %v429, 0
    %vm438 = vcmp.ge.s32.totalorder %v430, 0
    %vm439 = vcmp.ge.s32.totalorder %v431, 0
    %vm440 = vcmp.ge.s32.totalorder %v432, 0
    %vm441 = vcmp.lt.s32.totalorder %v425, 32
    %vm442 = vcmp.lt.s32.totalorder %v426, 32
    %vm443 = vcmp.lt.s32.totalorder %v427, 32
    %vm444 = vcmp.lt.s32.totalorder %v428, 32
    %vm445 = vcmp.lt.s32.totalorder %v429, 32
    %vm446 = vcmp.lt.s32.totalorder %v430, 32
    %vm447 = vcmp.lt.s32.totalorder %v431, 32
    %vm448 = vcmp.lt.s32.totalorder %v432, 32
    %vm449 = vmand %vm433, %vm441
    %vm450 = vmand %vm434, %vm442
    %vm451 = vmand %vm435, %vm443
    %vm452 = vmand %vm436, %vm444
    %vm453 = vmand %vm437, %vm445
    %vm454 = vmand %vm438, %vm446
    %vm455 = vmand %vm439, %vm447
    %vm456 = vmand %vm440, %vm448
    %v457 = vld [vmem:[#allocation2 + $0x3] sm:$0xff]
    %v458 = vld [vmem:[#allocation2 + $0xb] sm:$0xff]
    %v459 = vld [vmem:[#allocation2 + $0x13] sm:$0xff]
    %v460 = vld [vmem:[#allocation2 + $0x1b] sm:$0xff]
    %v461 = vld [vmem:[#allocation2 + $0x23] sm:$0xff]
    %v462 = vld [vmem:[#allocation2 + $0x2b] sm:$0xff]
    %v463 = vld [vmem:[#allocation2 + $0x33] sm:$0xff]
    %v464 = vld [vmem:[#allocation2 + $0x3b] sm:$0xff]
    %v465 = vsel %vm449, 1, 0
    %v466 = vsel %vm450, 1, 0
    %v467 = vsel %vm451, 1, 0
    %v468 = vsel %vm452, 1, 0
    %v469 = vsel %vm453, 1, 0
    %v470 = vsel %vm454, 1, 0
    %v471 = vsel %vm455, 1, 0
    %v472 = vsel %vm456, 1, 0
    %vm473 = vcmp.eq.s32.totalorder %v465, 1
    %vm474 = vcmp.eq.s32.totalorder %v466, 1
    %vm475 = vcmp.eq.s32.totalorder %v467, 1
    %vm476 = vcmp.eq.s32.totalorder %v468, 1
    %vm477 = vcmp.eq.s32.totalorder %v469, 1
    %vm478 = vcmp.eq.s32.totalorder %v470, 1
    %vm479 = vcmp.eq.s32.totalorder %v471, 1
    %vm480 = vcmp.eq.s32.totalorder %v472, 1
    %v481 = vsel %vm473, %v457, 0.0
    %v482 = vsel %vm474, %v458, 0.0
    %v483 = vsel %vm475, %v459, 0.0
    %v484 = vsel %vm476, %v460, 0.0
    %v485 = vsel %vm477, %v461, 0.0
    %v486 = vsel %vm478, %v462, 0.0
    %v487 = vsel %vm479, %v463, 0.0
    %v488 = vsel %vm480, %v464, 0.0
    %v489 = vadd.s32 %v225, 4294967292
    %v490 = vadd.s32 %v226, 4294967292
    %v491 = vadd.s32 %v227, 4294967292
    %v492 = vadd.s32 %v228, 4294967292
    %v493 = vadd.s32 %v229, 4294967292
    %v494 = vadd.s32 %v230, 4294967292
    %v495 = vadd.s32 %v231, 4294967292
    %v496 = vadd.s32 %v232, 4294967292
    %vm497 = vcmp.ge.s32.totalorder %v489, 0
    %vm498 = vcmp.ge.s32.totalorder %v490, 0
    %vm499 = vcmp.ge.s32.totalorder %v491, 0
    %vm500 = vcmp.ge.s32.totalorder %v492, 0
    %vm501 = vcmp.ge.s32.totalorder %v493, 0
    %vm502 = vcmp.ge.s32.totalorder %v494, 0
    %vm503 = vcmp.ge.s32.totalorder %v495, 0
    %vm504 = vcmp.ge.s32.totalorder %v496, 0
    %vm505 = vcmp.lt.s32.totalorder %v489, 32
    %vm506 = vcmp.lt.s32.totalorder %v490, 32
    %vm507 = vcmp.lt.s32.totalorder %v491, 32
    %vm508 = vcmp.lt.s32.totalorder %v492, 32
    %vm509 = vcmp.lt.s32.totalorder %v493, 32
    %vm510 = vcmp.lt.s32.totalorder %v494, 32
    %vm511 = vcmp.lt.s32.totalorder %v495, 32
    %vm512 = vcmp.lt.s32.totalorder %v496, 32
    %vm513 = vmand %vm497, %vm505
    %vm514 = vmand %vm498, %vm506
    %vm515 = vmand %vm499, %vm507
    %vm516 = vmand %vm500, %vm508
    %vm517 = vmand %vm501, %vm509
    %vm518 = vmand %vm502, %vm510
    %vm519 = vmand %vm503, %vm511
    %vm520 = vmand %vm504, %vm512
    %v521 = vld [vmem:[#allocation2 + $0x4] sm:$0xff]
    %v522 = vld [vmem:[#allocation2 + $0xc] sm:$0xff]
    %v523 = vld [vmem:[#allocation2 + $0x14] sm:$0xff]
    %v524 = vld [vmem:[#allocation2 + $0x1c] sm:$0xff]
    %v525 = vld [vmem:[#allocation2 + $0x24] sm:$0xff]
    %v526 = vld [vmem:[#allocation2 + $0x2c] sm:$0xff]
    %v527 = vld [vmem:[#allocation2 + $0x34] sm:$0xff]
    %v528 = vld [vmem:[#allocation2 + $0x3c] sm:$0xff]
    %v529 = vsel %vm513, 1, 0
    %v530 = vsel %vm514, 1, 0
    %v531 = vsel %vm515, 1, 0
    %v532 = vsel %vm516, 1, 0
    %v533 = vsel %vm517, 1, 0
    %v534 = vsel %vm518, 1, 0
    %v535 = vsel %vm519, 1, 0
    %v536 = vsel %vm520, 1, 0
    %vm537 = vcmp.eq.s32.totalorder %v529, 1
    %vm538 = vcmp.eq.s32.totalorder %v530, 1
    %vm539 = vcmp.eq.s32.totalorder %v531, 1
    %vm540 = vcmp.eq.s32.totalorder %v532, 1
    %vm541 = vcmp.eq.s32.totalorder %v533, 1
    %vm542 = vcmp.eq.s32.totalorder %v534, 1
    %vm543 = vcmp.eq.s32.totalorder %v535, 1
    %vm544 = vcmp.eq.s32.totalorder %v536, 1
    %v545 = vsel %vm537, %v521, 0.0
    %v546 = vsel %vm538, %v522, 0.0
    %v547 = vsel %vm539, %v523, 0.0
    %v548 = vsel %vm540, %v524, 0.0
    %v549 = vsel %vm541, %v525, 0.0
    %v550 = vsel %vm542, %v526, 0.0
    %v551 = vsel %vm543, %v527, 0.0
    %v552 = vsel %vm544, %v528, 0.0
    %v553 = vadd.s32 %v225, 4294967293
    %v554 = vadd.s32 %v226, 4294967293
    %v555 = vadd.s32 %v227, 4294967293
    %v556 = vadd.s32 %v228, 4294967293
    %v557 = vadd.s32 %v229, 4294967293
    %v558 = vadd.s32 %v230, 4294967293
    %v559 = vadd.s32 %v231, 4294967293
    %v560 = vadd.s32 %v232, 4294967293
    %vm561 = vcmp.ge.s32.totalorder %v553, 0
    %vm562 = vcmp.ge.s32.totalorder %v554, 0
    %vm563 = vcmp.ge.s32.totalorder %v555, 0
    %vm564 = vcmp.ge.s32.totalorder %v556, 0
    %vm565 = vcmp.ge.s32.totalorder %v557, 0
    %vm566 = vcmp.ge.s32.totalorder %v558, 0
    %vm567 = vcmp.ge.s32.totalorder %v559, 0
    %vm568 = vcmp.ge.s32.totalorder %v560, 0
    %vm569 = vcmp.lt.s32.totalorder %v553, 32
    %vm570 = vcmp.lt.s32.totalorder %v554, 32
    %vm571 = vcmp.lt.s32.totalorder %v555, 32
    %vm572 = vcmp.lt.s32.totalorder %v556, 32
    %vm573 = vcmp.lt.s32.totalorder %v557, 32
    %vm574 = vcmp.lt.s32.totalorder %v558, 32
    %vm575 = vcmp.lt.s32.totalorder %v559, 32
    %vm576 = vcmp.lt.s32.totalorder %v560, 32
    %vm577 = vmand %vm561, %vm569
    %vm578 = vmand %vm562, %vm570
    %vm579 = vmand %vm563, %vm571
    %vm580 = vmand %vm564, %vm572
    %vm581 = vmand %vm565, %vm573
    %vm582 = vmand %vm566, %vm574
    %vm583 = vmand %vm567, %vm575
    %vm584 = vmand %vm568, %vm576
    %v585 = vld [vmem:[#allocation2 + $0x5] sm:$0xff]
    %v586 = vld [vmem:[#allocation2 + $0xd] sm:$0xff]
    %v587 = vld [vmem:[#allocation2 + $0x15] sm:$0xff]
    %v588 = vld [vmem:[#allocation2 + $0x1d] sm:$0xff]
    %v589 = vld [vmem:[#allocation2 + $0x25] sm:$0xff]
    %v590 = vld [vmem:[#allocation2 + $0x2d] sm:$0xff]
    %v591 = vld [vmem:[#allocation2 + $0x35] sm:$0xff]
    %v592 = vld [vmem:[#allocation2 + $0x3d] sm:$0xff]
    %v593 = vsel %vm577, 1, 0
    %v594 = vsel %vm578, 1, 0
    %v595 = vsel %vm579, 1, 0
    %v596 = vsel %vm580, 1, 0
    %v597 = vsel %vm581, 1, 0
    %v598 = vsel %vm582, 1, 0
    %v599 = vsel %vm583, 1, 0
    %v600 = vsel %vm584, 1, 0
    %vm601 = vcmp.eq.s32.totalorder %v593, 1
    %vm602 = vcmp.eq.s32.totalorder %v594, 1
    %vm603 = vcmp.eq.s32.totalorder %v595, 1
    %vm604 = vcmp.eq.s32.totalorder %v596, 1
    %vm605 = vcmp.eq.s32.totalorder %v597, 1
    %vm606 = vcmp.eq.s32.totalorder %v598, 1
    %vm607 = vcmp.eq.s32.totalorder %v599, 1
    %vm608 = vcmp.eq.s32.totalorder %v600, 1
    %v609 = vsel %vm601, %v585, 0.0
    %v610 = vsel %vm602, %v586, 0.0
    %v611 = vsel %vm603, %v587, 0.0
    %v612 = vsel %vm604, %v588, 0.0
    %v613 = vsel %vm605, %v589, 0.0
    %v614 = vsel %vm606, %v590, 0.0
    %v615 = vsel %vm607, %v591, 0.0
    %v616 = vsel %vm608, %v592, 0.0
    %v617 = vadd.s32 %v225, 4294967294
    %v618 = vadd.s32 %v226, 4294967294
    %v619 = vadd.s32 %v227, 4294967294
    %v620 = vadd.s32 %v228, 4294967294
    %v621 = vadd.s32 %v229, 4294967294
    %v622 = vadd.s32 %v230, 4294967294
    %v623 = vadd.s32 %v231, 4294967294
    %v624 = vadd.s32 %v232, 4294967294
    %vm625 = vcmp.ge.s32.totalorder %v617, 0
    %vm626 = vcmp.ge.s32.totalorder %v618, 0
    %vm627 = vcmp.ge.s32.totalorder %v619, 0
    %vm628 = vcmp.ge.s32.totalorder %v620, 0
    %vm629 = vcmp.ge.s32.totalorder %v621, 0
    %vm630 = vcmp.ge.s32.totalorder %v622, 0
    %vm631 = vcmp.ge.s32.totalorder %v623, 0
    %vm632 = vcmp.ge.s32.totalorder %v624, 0
    %vm633 = vcmp.lt.s32.totalorder %v617, 32
    %vm634 = vcmp.lt.s32.totalorder %v618, 32
    %vm635 = vcmp.lt.s32.totalorder %v619, 32
    %vm636 = vcmp.lt.s32.totalorder %v620, 32
    %vm637 = vcmp.lt.s32.totalorder %v621, 32
    %vm638 = vcmp.lt.s32.totalorder %v622, 32
    %vm639 = vcmp.lt.s32.totalorder %v623, 32
    %vm640 = vcmp.lt.s32.totalorder %v624, 32
    %vm641 = vmand %vm625, %vm633
    %vm642 = vmand %vm626, %vm634
    %vm643 = vmand %vm627, %vm635
    %vm644 = vmand %vm628, %vm636
    %vm645 = vmand %vm629, %vm637
    %vm646 = vmand %vm630, %vm638
    %vm647 = vmand %vm631, %vm639
    %vm648 = vmand %vm632, %vm640
    %v649 = vld [vmem:[#allocation2 + $0x6] sm:$0xff]
    %v650 = vld [vmem:[#allocation2 + $0xe] sm:$0xff]
    %v651 = vld [vmem:[#allocation2 + $0x16] sm:$0xff]
    %v652 = vld [vmem:[#allocation2 + $0x1e] sm:$0xff]
    %v653 = vld [vmem:[#allocation2 + $0x26] sm:$0xff]
    %v654 = vld [vmem:[#allocation2 + $0x2e] sm:$0xff]
    %v655 = vld [vmem:[#allocation2 + $0x36] sm:$0xff]
    %v656 = vld [vmem:[#allocation2 + $0x3e] sm:$0xff]
    %v657 = vsel %vm641, 1, 0
    %v658 = vsel %vm642, 1, 0
    %v659 = vsel %vm643, 1, 0
    %v660 = vsel %vm644, 1, 0
    %v661 = vsel %vm645, 1, 0
    %v662 = vsel %vm646, 1, 0
    %v663 = vsel %vm647, 1, 0
    %v664 = vsel %vm648, 1, 0
    %vm665 = vcmp.eq.s32.totalorder %v657, 1
    %vm666 = vcmp.eq.s32.totalorder %v658, 1
    %vm667 = vcmp.eq.s32.totalorder %v659, 1
    %vm668 = vcmp.eq.s32.totalorder %v660, 1
    %vm669 = vcmp.eq.s32.totalorder %v661, 1
    %vm670 = vcmp.eq.s32.totalorder %v662, 1
    %vm671 = vcmp.eq.s32.totalorder %v663, 1
    %vm672 = vcmp.eq.s32.totalorder %v664, 1
    %v673 = vsel %vm665, %v649, 0.0
    %v674 = vsel %vm666, %v650, 0.0
    %v675 = vsel %vm667, %v651, 0.0
    %v676 = vsel %vm668, %v652, 0.0
    %v677 = vsel %vm669, %v653, 0.0
    %v678 = vsel %vm670, %v654, 0.0
    %v679 = vsel %vm671, %v655, 0.0
    %v680 = vsel %vm672, %v656, 0.0
    %v681 = vadd.s32 %v225, 4294967295
    %v682 = vadd.s32 %v226, 4294967295
    %v683 = vadd.s32 %v227, 4294967295
    %v684 = vadd.s32 %v228, 4294967295
    %v685 = vadd.s32 %v229, 4294967295
    %v686 = vadd.s32 %v230, 4294967295
    %v687 = vadd.s32 %v231, 4294967295
    %v688 = vadd.s32 %v232, 4294967295
    %vm689 = vcmp.ge.s32.totalorder %v681, 0
    %vm690 = vcmp.ge.s32.totalorder %v682, 0
    %vm691 = vcmp.ge.s32.totalorder %v683, 0
    %vm692 = vcmp.ge.s32.totalorder %v684, 0
    %vm693 = vcmp.ge.s32.totalorder %v685, 0
    %vm694 = vcmp.ge.s32.totalorder %v686, 0
    %vm695 = vcmp.ge.s32.totalorder %v687, 0
    %vm696 = vcmp.ge.s32.totalorder %v688, 0
    %vm697 = vcmp.lt.s32.totalorder %v681, 32
    %vm698 = vcmp.lt.s32.totalorder %v682, 32
    %vm699 = vcmp.lt.s32.totalorder %v683, 32
    %vm700 = vcmp.lt.s32.totalorder %v684, 32
    %vm701 = vcmp.lt.s32.totalorder %v685, 32
    %vm702 = vcmp.lt.s32.totalorder %v686, 32
    %vm703 = vcmp.lt.s32.totalorder %v687, 32
    %vm704 = vcmp.lt.s32.totalorder %v688, 32
    %vm705 = vmand %vm689, %vm697
    %vm706 = vmand %vm690, %vm698
    %vm707 = vmand %vm691, %vm699
    %vm708 = vmand %vm692, %vm700
    %vm709 = vmand %vm693, %vm701
    %vm710 = vmand %vm694, %vm702
    %vm711 = vmand %vm695, %vm703
    %vm712 = vmand %vm696, %vm704
    %v713 = vld [vmem:[#allocation2 + $0x7] sm:$0xff]
    %v714 = vld [vmem:[#allocation2 + $0xf] sm:$0xff]
    %v715 = vld [vmem:[#allocation2 + $0x17] sm:$0xff]
    %v716 = vld [vmem:[#allocation2 + $0x1f] sm:$0xff]
    %v717 = vld [vmem:[#allocation2 + $0x27] sm:$0xff]
    %v718 = vld [vmem:[#allocation2 + $0x2f] sm:$0xff]
    %v719 = vld [vmem:[#allocation2 + $0x37] sm:$0xff]
    %v720 = vld [vmem:[#allocation2 + $0x3f] sm:$0xff]
    %v721 = vsel %vm705, 1, 0
    %v722 = vsel %vm706, 1, 0
    %v723 = vsel %vm707, 1, 0
    %v724 = vsel %vm708, 1, 0
    %v725 = vsel %vm709, 1, 0
    %v726 = vsel %vm710, 1, 0
    %v727 = vsel %vm711, 1, 0
    %v728 = vsel %vm712, 1, 0
    %vm729 = vcmp.eq.s32.totalorder %v721, 1
    %vm730 = vcmp.eq.s32.totalorder %v722, 1
    %vm731 = vcmp.eq.s32.totalorder %v723, 1
    %vm732 = vcmp.eq.s32.totalorder %v724, 1
    %vm733 = vcmp.eq.s32.totalorder %v725, 1
    %vm734 = vcmp.eq.s32.totalorder %v726, 1
    %vm735 = vcmp.eq.s32.totalorder %v727, 1
    %vm736 = vcmp.eq.s32.totalorder %v728, 1
    %v737 = vsel %vm729, %v713, 0.0
    %v738 = vsel %vm730, %v714, 0.0
    %v739 = vsel %vm731, %v715, 0.0
    %v740 = vsel %vm732, %v716, 0.0
    %v741 = vsel %vm733, %v717, 0.0
    %v742 = vsel %vm734, %v718, 0.0
    %v743 = vsel %vm735, %v719, 0.0
    %v744 = vsel %vm736, %v720, 0.0
    %vm745 = vcmp.ge.s32.totalorder %v225, 0
    %vm746 = vcmp.ge.s32.totalorder %v226, 0
    %vm747 = vcmp.ge.s32.totalorder %v227, 0
    %vm748 = vcmp.ge.s32.totalorder %v228, 0
    %vm749 = vcmp.ge.s32.totalorder %v229, 0
    %vm750 = vcmp.ge.s32.totalorder %v230, 0
    %vm751 = vcmp.ge.s32.totalorder %v231, 0
    %vm752 = vcmp.ge.s32.totalorder %v232, 0
    %vm753 = vcmp.lt.s32.totalorder %v225, 32
    %vm754 = vcmp.lt.s32.totalorder %v226, 32
    %vm755 = vcmp.lt.s32.totalorder %v227, 32
    %vm756 = vcmp.lt.s32.totalorder %v228, 32
    %vm757 = vcmp.lt.s32.totalorder %v229, 32
    %vm758 = vcmp.lt.s32.totalorder %v230, 32
    %vm759 = vcmp.lt.s32.totalorder %v231, 32
    %vm760 = vcmp.lt.s32.totalorder %v232, 32
    %vm761 = vmand %vm745, %vm753
    %vm762 = vmand %vm746, %vm754
    %vm763 = vmand %vm747, %vm755
    %vm764 = vmand %vm748, %vm756
    %vm765 = vmand %vm749, %vm757
    %vm766 = vmand %vm750, %vm758
    %vm767 = vmand %vm751, %vm759
    %vm768 = vmand %vm752, %vm760
    %v769 = vld [vmem:[#allocation2 + $0x40] sm:$0xff]
    %v770 = vsel %vm761, 1, 0
    %v771 = vsel %vm762, 1, 0
    %v772 = vsel %vm763, 1, 0
    %v773 = vsel %vm764, 1, 0
    %v774 = vsel %vm765, 1, 0
    %v775 = vsel %vm766, 1, 0
    %v776 = vsel %vm767, 1, 0
    %v777 = vsel %vm768, 1, 0
    %vm778 = vcmp.eq.s32.totalorder %v770, 1
    %vm779 = vcmp.eq.s32.totalorder %v771, 1
    %vm780 = vcmp.eq.s32.totalorder %v772, 1
    %vm781 = vcmp.eq.s32.totalorder %v773, 1
    %vm782 = vcmp.eq.s32.totalorder %v774, 1
    %vm783 = vcmp.eq.s32.totalorder %v775, 1
    %vm784 = vcmp.eq.s32.totalorder %v776, 1
    %vm785 = vcmp.eq.s32.totalorder %v777, 1
    %v786 = vsel %vm778, %v266, 0.0
    %v787 = vsel %vm779, %v267, 0.0
    %v788 = vsel %vm780, %v268, 0.0
    %v789 = vsel %vm781, %v269, 0.0
    %v790 = vsel %vm782, %v270, 0.0
    %v791 = vsel %vm783, %v271, 0.0
    %v792 = vsel %vm784, %v272, 0.0
    %v793 = vsel %vm785, %v769, 0.0
    %v794 = vadd.s32 %v225, 1
    %v795 = vadd.s32 %v226, 1
    %v796 = vadd.s32 %v227, 1
    %v797 = vadd.s32 %v228, 1
    %v798 = vadd.s32 %v229, 1
    %v799 = vadd.s32 %v230, 1
    %v800 = vadd.s32 %v231, 1
    %v801 = vadd.s32 %v232, 1
    %vm802 = vcmp.ge.s32.totalorder %v794, 0
    %vm803 = vcmp.ge.s32.totalorder %v795, 0
    %vm804 = vcmp.ge.s32.totalorder %v796, 0
    %vm805 = vcmp.ge.s32.totalorder %v797, 0
    %vm806 = vcmp.ge.s32.totalorder %v798, 0
    %vm807 = vcmp.ge.s32.totalorder %v799, 0
    %vm808 = vcmp.ge.s32.totalorder %v800, 0
    %vm809 = vcmp.ge.s32.totalorder %v801, 0
    %vm810 = vcmp.lt.s32.totalorder %v794, 32
    %vm811 = vcmp.lt.s32.totalorder %v795, 32
    %vm812 = vcmp.lt.s32.totalorder %v796, 32
    %vm813 = vcmp.lt.s32.totalorder %v797, 32
    %vm814 = vcmp.lt.s32.totalorder %v798, 32
    %vm815 = vcmp.lt.s32.totalorder %v799, 32
    %vm816 = vcmp.lt.s32.totalorder %v800, 32
    %vm817 = vcmp.lt.s32.totalorder %v801, 32
    %vm818 = vmand %vm802, %vm810
    %vm819 = vmand %vm803, %vm811
    %vm820 = vmand %vm804, %vm812
    %vm821 = vmand %vm805, %vm813
    %vm822 = vmand %vm806, %vm814
    %vm823 = vmand %vm807, %vm815
    %vm824 = vmand %vm808, %vm816
    %vm825 = vmand %vm809, %vm817
    %v826 = vld [vmem:[#allocation2 + $0x41] sm:$0xff]
    %v827 = vsel %vm818, 1, 0
    %v828 = vsel %vm819, 1, 0
    %v829 = vsel %vm820, 1, 0
    %v830 = vsel %vm821, 1, 0
    %v831 = vsel %vm822, 1, 0
    %v832 = vsel %vm823, 1, 0
    %v833 = vsel %vm824, 1, 0
    %v834 = vsel %vm825, 1, 0
    %vm835 = vcmp.eq.s32.totalorder %v827, 1
    %vm836 = vcmp.eq.s32.totalorder %v828, 1
    %vm837 = vcmp.eq.s32.totalorder %v829, 1
    %vm838 = vcmp.eq.s32.totalorder %v830, 1
    %vm839 = vcmp.eq.s32.totalorder %v831, 1
    %vm840 = vcmp.eq.s32.totalorder %v832, 1
    %vm841 = vcmp.eq.s32.totalorder %v833, 1
    %vm842 = vcmp.eq.s32.totalorder %v834, 1
    %v843 = vsel %vm835, %v330, 0.0
    %v844 = vsel %vm836, %v331, 0.0
    %v845 = vsel %vm837, %v332, 0.0
    %v846 = vsel %vm838, %v333, 0.0
    %v847 = vsel %vm839, %v334, 0.0
    %v848 = vsel %vm840, %v335, 0.0
    %v849 = vsel %vm841, %v336, 0.0
    %v850 = vsel %vm842, %v826, 0.0
    %v851 = vadd.s32 %v225, 2
    %v852 = vadd.s32 %v226, 2
    %v853 = vadd.s32 %v227, 2
    %v854 = vadd.s32 %v228, 2
    %v855 = vadd.s32 %v229, 2
    %v856 = vadd.s32 %v230, 2
    %v857 = vadd.s32 %v231, 2
    %v858 = vadd.s32 %v232, 2
    %vm859 = vcmp.ge.s32.totalorder %v851, 0
    %vm860 = vcmp.ge.s32.totalorder %v852, 0
    %vm861 = vcmp.ge.s32.totalorder %v853, 0
    %vm862 = vcmp.ge.s32.totalorder %v854, 0
    %vm863 = vcmp.ge.s32.totalorder %v855, 0
    %vm864 = vcmp.ge.s32.totalorder %v856, 0
    %vm865 = vcmp.ge.s32.totalorder %v857, 0
    %vm866 = vcmp.ge.s32.totalorder %v858, 0
    %vm867 = vcmp.lt.s32.totalorder %v851, 32
    %vm868 = vcmp.lt.s32.totalorder %v852, 32
    %vm869 = vcmp.lt.s32.totalorder %v853, 32
    %vm870 = vcmp.lt.s32.totalorder %v854, 32
    %vm871 = vcmp.lt.s32.totalorder %v855, 32
    %vm872 = vcmp.lt.s32.totalorder %v856, 32
    %vm873 = vcmp.lt.s32.totalorder %v857, 32
    %vm874 = vcmp.lt.s32.totalorder %v858, 32
    %vm875 = vmand %vm859, %vm867
    %vm876 = vmand %vm860, %vm868
    %vm877 = vmand %vm861, %vm869
    %vm878 = vmand %vm862, %vm870
    %vm879 = vmand %vm863, %vm871
    %vm880 = vmand %vm864, %vm872
    %vm881 = vmand %vm865, %vm873
    %vm882 = vmand %vm866, %vm874
    %v883 = vld [vmem:[#allocation2 + $0x42] sm:$0xff]
    %v884 = vsel %vm875, 1, 0
    %v885 = vsel %vm876, 1, 0
    %v886 = vsel %vm877, 1, 0
    %v887 = vsel %vm878, 1, 0
    %v888 = vsel %vm879, 1, 0
    %v889 = vsel %vm880, 1, 0
    %v890 = vsel %vm881, 1, 0
    %v891 = vsel %vm882, 1, 0
    %vm892 = vcmp.eq.s32.totalorder %v884, 1
    %vm893 = vcmp.eq.s32.totalorder %v885, 1
    %vm894 = vcmp.eq.s32.totalorder %v886, 1
    %vm895 = vcmp.eq.s32.totalorder %v887, 1
    %vm896 = vcmp.eq.s32.totalorder %v888, 1
    %vm897 = vcmp.eq.s32.totalorder %v889, 1
    %vm898 = vcmp.eq.s32.totalorder %v890, 1
    %vm899 = vcmp.eq.s32.totalorder %v891, 1
    %v900 = vsel %vm892, %v394, 0.0
    %v901 = vsel %vm893, %v395, 0.0
    %v902 = vsel %vm894, %v396, 0.0
    %v903 = vsel %vm895, %v397, 0.0
    %v904 = vsel %vm896, %v398, 0.0
    %v905 = vsel %vm897, %v399, 0.0
    %v906 = vsel %vm898, %v400, 0.0
    %v907 = vsel %vm899, %v883, 0.0
    %v908 = vadd.s32 %v225, 3
    %v909 = vadd.s32 %v226, 3
    %v910 = vadd.s32 %v227, 3
    %v911 = vadd.s32 %v228, 3
    %v912 = vadd.s32 %v229, 3
    %v913 = vadd.s32 %v230, 3
    %v914 = vadd.s32 %v231, 3
    %v915 = vadd.s32 %v232, 3
    %vm916 = vcmp.ge.s32.totalorder %v908, 0
    %vm917 = vcmp.ge.s32.totalorder %v909, 0
    %vm918 = vcmp.ge.s32.totalorder %v910, 0
    %vm919 = vcmp.ge.s32.totalorder %v911, 0
    %vm920 = vcmp.ge.s32.totalorder %v912, 0
    %vm921 = vcmp.ge.s32.totalorder %v913, 0
    %vm922 = vcmp.ge.s32.totalorder %v914, 0
    %vm923 = vcmp.ge.s32.totalorder %v915, 0
    %vm924 = vcmp.lt.s32.totalorder %v908, 32
    %vm925 = vcmp.lt.s32.totalorder %v909, 32
    %vm926 = vcmp.lt.s32.totalorder %v910, 32
    %vm927 = vcmp.lt.s32.totalorder %v911, 32
    %vm928 = vcmp.lt.s32.totalorder %v912, 32
    %vm929 = vcmp.lt.s32.totalorder %v913, 32
    %vm930 = vcmp.lt.s32.totalorder %v914, 32
    %vm931 = vcmp.lt.s32.totalorder %v915, 32
    %vm932 = vmand %vm916, %vm924
    %vm933 = vmand %vm917, %vm925
    %vm934 = vmand %vm918, %vm926
    %vm935 = vmand %vm919, %vm927
    %vm936 = vmand %vm920, %vm928
    %vm937 = vmand %vm921, %vm929
    %vm938 = vmand %vm922, %vm930
    %vm939 = vmand %vm923, %vm931
    %v940 = vld [vmem:[#allocation2 + $0x43] sm:$0xff]
    %v941 = vsel %vm932, 1, 0
    %v942 = vsel %vm933, 1, 0
    %v943 = vsel %vm934, 1, 0
    %v944 = vsel %vm935, 1, 0
    %v945 = vsel %vm936, 1, 0
    %v946 = vsel %vm937, 1, 0
    %v947 = vsel %vm938, 1, 0
    %v948 = vsel %vm939, 1, 0
    %vm949 = vcmp.eq.s32.totalorder %v941, 1
    %vm950 = vcmp.eq.s32.totalorder %v942, 1
    %vm951 = vcmp.eq.s32.totalorder %v943, 1
    %vm952 = vcmp.eq.s32.totalorder %v944, 1
    %vm953 = vcmp.eq.s32.totalorder %v945, 1
    %vm954 = vcmp.eq.s32.totalorder %v946, 1
    %vm955 = vcmp.eq.s32.totalorder %v947, 1
    %vm956 = vcmp.eq.s32.totalorder %v948, 1
    %v957 = vsel %vm949, %v458, 0.0
    %v958 = vsel %vm950, %v459, 0.0
    %v959 = vsel %vm951, %v460, 0.0
    %v960 = vsel %vm952, %v461, 0.0
    %v961 = vsel %vm953, %v462, 0.0
    %v962 = vsel %vm954, %v463, 0.0
    %v963 = vsel %vm955, %v464, 0.0
    %v964 = vsel %vm956, %v940, 0.0
    %v965 = vadd.s32 %v225, 4
    %v966 = vadd.s32 %v226, 4
    %v967 = vadd.s32 %v227, 4
    %v968 = vadd.s32 %v228, 4
    %v969 = vadd.s32 %v229, 4
    %v970 = vadd.s32 %v230, 4
    %v971 = vadd.s32 %v231, 4
    %v972 = vadd.s32 %v232, 4
    %vm973 = vcmp.ge.s32.totalorder %v965, 0
    %vm974 = vcmp.ge.s32.totalorder %v966, 0
    %vm975 = vcmp.ge.s32.totalorder %v967, 0
    %vm976 = vcmp.ge.s32.totalorder %v968, 0
    %vm977 = vcmp.ge.s32.totalorder %v969, 0
    %vm978 = vcmp.ge.s32.totalorder %v970, 0
    %vm979 = vcmp.ge.s32.totalorder %v971, 0
    %vm980 = vcmp.ge.s32.totalorder %v972, 0
    %vm981 = vcmp.lt.s32.totalorder %v965, 32
    %vm982 = vcmp.lt.s32.totalorder %v966, 32
    %vm983 = vcmp.lt.s32.totalorder %v967, 32
    %vm984 = vcmp.lt.s32.totalorder %v968, 32
    %vm985 = vcmp.lt.s32.totalorder %v969, 32
    %vm986 = vcmp.lt.s32.totalorder %v970, 32
    %vm987 = vcmp.lt.s32.totalorder %v971, 32
    %vm988 = vcmp.lt.s32.totalorder %v972, 32
    %vm989 = vmand %vm973, %vm981
    %vm990 = vmand %vm974, %vm982
    %vm991 = vmand %vm975, %vm983
    %vm992 = vmand %vm976, %vm984
    %vm993 = vmand %vm977, %vm985
    %vm994 = vmand %vm978, %vm986
    %vm995 = vmand %vm979, %vm987
    %vm996 = vmand %vm980, %vm988
    %v997 = vld [vmem:[#allocation2 + $0x44] sm:$0xff]
    %v998 = vsel %vm989, 1, 0
    %v999 = vsel %vm990, 1, 0
    %v1000 = vsel %vm991, 1, 0
    %v1001 = vsel %vm992, 1, 0
    %v1002 = vsel %vm993, 1, 0
    %v1003 = vsel %vm994, 1, 0
    %v1004 = vsel %vm995, 1, 0
    %v1005 = vsel %vm996, 1, 0
    %vm1006 = vcmp.eq.s32.totalorder %v998, 1
    %vm1007 = vcmp.eq.s32.totalorder %v999, 1
    %vm1008 = vcmp.eq.s32.totalorder %v1000, 1
    %vm1009 = vcmp.eq.s32.totalorder %v1001, 1
    %vm1010 = vcmp.eq.s32.totalorder %v1002, 1
    %vm1011 = vcmp.eq.s32.totalorder %v1003, 1
    %vm1012 = vcmp.eq.s32.totalorder %v1004, 1
    %vm1013 = vcmp.eq.s32.totalorder %v1005, 1
    %v1014 = vsel %vm1006, %v522, 0.0
    %v1015 = vsel %vm1007, %v523, 0.0
    %v1016 = vsel %vm1008, %v524, 0.0
    %v1017 = vsel %vm1009, %v525, 0.0
    %v1018 = vsel %vm1010, %v526, 0.0
    %v1019 = vsel %vm1011, %v527, 0.0
    %v1020 = vsel %vm1012, %v528, 0.0
    %v1021 = vsel %vm1013, %v997, 0.0
    %v1022 = vadd.s32 %v225, 5
    %v1023 = vadd.s32 %v226, 5
    %v1024 = vadd.s32 %v227, 5
    %v1025 = vadd.s32 %v228, 5
    %v1026 = vadd.s32 %v229, 5
    %v1027 = vadd.s32 %v230, 5
    %v1028 = vadd.s32 %v231, 5
    %v1029 = vadd.s32 %v232, 5
    %vm1030 = vcmp.ge.s32.totalorder %v1022, 0
    %vm1031 = vcmp.ge.s32.totalorder %v1023, 0
    %vm1032 = vcmp.ge.s32.totalorder %v1024, 0
    %vm1033 = vcmp.ge.s32.totalorder %v1025, 0
    %vm1034 = vcmp.ge.s32.totalorder %v1026, 0
    %vm1035 = vcmp.ge.s32.totalorder %v1027, 0
    %vm1036 = vcmp.ge.s32.totalorder %v1028, 0
    %vm1037 = vcmp.ge.s32.totalorder %v1029, 0
    %vm1038 = vcmp.lt.s32.totalorder %v1022, 32
    %vm1039 = vcmp.lt.s32.totalorder %v1023, 32
    %vm1040 = vcmp.lt.s32.totalorder %v1024, 32
    %vm1041 = vcmp.lt.s32.totalorder %v1025, 32
    %vm1042 = vcmp.lt.s32.totalorder %v1026, 32
    %vm1043 = vcmp.lt.s32.totalorder %v1027, 32
    %vm1044 = vcmp.lt.s32.totalorder %v1028, 32
    %vm1045 = vcmp.lt.s32.totalorder %v1029, 32
    %vm1046 = vmand %vm1030, %vm1038
    %vm1047 = vmand %vm1031, %vm1039
    %vm1048 = vmand %vm1032, %vm1040
    %vm1049 = vmand %vm1033, %vm1041
    %vm1050 = vmand %vm1034, %vm1042
    %vm1051 = vmand %vm1035, %vm1043
    %vm1052 = vmand %vm1036, %vm1044
    %vm1053 = vmand %vm1037, %vm1045
    %v1054 = vld [vmem:[#allocation2 + $0x45] sm:$0xff]
    %v1055 = vsel %vm1046, 1, 0
    %v1056 = vsel %vm1047, 1, 0
    %v1057 = vsel %vm1048, 1, 0
    %v1058 = vsel %vm1049, 1, 0
    %v1059 = vsel %vm1050, 1, 0
    %v1060 = vsel %vm1051, 1, 0
    %v1061 = vsel %vm1052, 1, 0
    %v1062 = vsel %vm1053, 1, 0
    %vm1063 = vcmp.eq.s32.totalorder %v1055, 1
    %vm1064 = vcmp.eq.s32.totalorder %v1056, 1
    %vm1065 = vcmp.eq.s32.totalorder %v1057, 1
    %vm1066 = vcmp.eq.s32.totalorder %v1058, 1
    %vm1067 = vcmp.eq.s32.totalorder %v1059, 1
    %vm1068 = vcmp.eq.s32.totalorder %v1060, 1
    %vm1069 = vcmp.eq.s32.totalorder %v1061, 1
    %vm1070 = vcmp.eq.s32.totalorder %v1062, 1
    %v1071 = vsel %vm1063, %v586, 0.0
    %v1072 = vsel %vm1064, %v587, 0.0
    %v1073 = vsel %vm1065, %v588, 0.0
    %v1074 = vsel %vm1066, %v589, 0.0
    %v1075 = vsel %vm1067, %v590, 0.0
    %v1076 = vsel %vm1068, %v591, 0.0
    %v1077 = vsel %vm1069, %v592, 0.0
    %v1078 = vsel %vm1070, %v1054, 0.0
    %v1079 = vadd.s32 %v225, 6
    %v1080 = vadd.s32 %v226, 6
    %v1081 = vadd.s32 %v227, 6
    %v1082 = vadd.s32 %v228, 6
    %v1083 = vadd.s32 %v229, 6
    %v1084 = vadd.s32 %v230, 6
    %v1085 = vadd.s32 %v231, 6
    %v1086 = vadd.s32 %v232, 6
    %vm1087 = vcmp.ge.s32.totalorder %v1079, 0
    %vm1088 = vcmp.ge.s32.totalorder %v1080, 0
    %vm1089 = vcmp.ge.s32.totalorder %v1081, 0
    %vm1090 = vcmp.ge.s32.totalorder %v1082, 0
    %vm1091 = vcmp.ge.s32.totalorder %v1083, 0
    %vm1092 = vcmp.ge.s32.totalorder %v1084, 0
    %vm1093 = vcmp.ge.s32.totalorder %v1085, 0
    %vm1094 = vcmp.ge.s32.totalorder %v1086, 0
    %vm1095 = vcmp.lt.s32.totalorder %v1079, 32
    %vm1096 = vcmp.lt.s32.totalorder %v1080, 32
    %vm1097 = vcmp.lt.s32.totalorder %v1081, 32
    %vm1098 = vcmp.lt.s32.totalorder %v1082, 32
    %vm1099 = vcmp.lt.s32.totalorder %v1083, 32
    %vm1100 = vcmp.lt.s32.totalorder %v1084, 32
    %vm1101 = vcmp.lt.s32.totalorder %v1085, 32
    %vm1102 = vcmp.lt.s32.totalorder %v1086, 32
    %vm1103 = vmand %vm1087, %vm1095
    %vm1104 = vmand %vm1088, %vm1096
    %vm1105 = vmand %vm1089, %vm1097
    %vm1106 = vmand %vm1090, %vm1098
    %vm1107 = vmand %vm1091, %vm1099
    %vm1108 = vmand %vm1092, %vm1100
    %vm1109 = vmand %vm1093, %vm1101
    %vm1110 = vmand %vm1094, %vm1102
    %v1111 = vld [vmem:[#allocation2 + $0x46] sm:$0xff]
    %v1112 = vsel %vm1103, 1, 0
    %v1113 = vsel %vm1104, 1, 0
    %v1114 = vsel %vm1105, 1, 0
    %v1115 = vsel %vm1106, 1, 0
    %v1116 = vsel %vm1107, 1, 0
    %v1117 = vsel %vm1108, 1, 0
    %v1118 = vsel %vm1109, 1, 0
    %v1119 = vsel %vm1110, 1, 0
    %vm1120 = vcmp.eq.s32.totalorder %v1112, 1
    %vm1121 = vcmp.eq.s32.totalorder %v1113, 1
    %vm1122 = vcmp.eq.s32.totalorder %v1114, 1
    %vm1123 = vcmp.eq.s32.totalorder %v1115, 1
    %vm1124 = vcmp.eq.s32.totalorder %v1116, 1
    %vm1125 = vcmp.eq.s32.totalorder %v1117, 1
    %vm1126 = vcmp.eq.s32.totalorder %v1118, 1
    %vm1127 = vcmp.eq.s32.totalorder %v1119, 1
    %v1128 = vsel %vm1120, %v650, 0.0
    %v1129 = vsel %vm1121, %v651, 0.0
    %v1130 = vsel %vm1122, %v652, 0.0
    %v1131 = vsel %vm1123, %v653, 0.0
    %v1132 = vsel %vm1124, %v654, 0.0
    %v1133 = vsel %vm1125, %v655, 0.0
    %v1134 = vsel %vm1126, %v656, 0.0
    %v1135 = vsel %vm1127, %v1111, 0.0
    %v1136 = vadd.s32 %v225, 7
    %v1137 = vadd.s32 %v226, 7
    %v1138 = vadd.s32 %v227, 7
    %v1139 = vadd.s32 %v228, 7
    %v1140 = vadd.s32 %v229, 7
    %v1141 = vadd.s32 %v230, 7
    %v1142 = vadd.s32 %v231, 7
    %v1143 = vadd.s32 %v232, 7
    %vm1144 = vcmp.ge.s32.totalorder %v1136, 0
    %vm1145 = vcmp.ge.s32.totalorder %v1137, 0
    %vm1146 = vcmp.ge.s32.totalorder %v1138, 0
    %vm1147 = vcmp.ge.s32.totalorder %v1139, 0
    %vm1148 = vcmp.ge.s32.totalorder %v1140, 0
    %vm1149 = vcmp.ge.s32.totalorder %v1141, 0
    %vm1150 = vcmp.ge.s32.totalorder %v1142, 0
    %vm1151 = vcmp.ge.s32.totalorder %v1143, 0
    %vm1152 = vcmp.lt.s32.totalorder %v1136, 32
    %vm1153 = vcmp.lt.s32.totalorder %v1137, 32
    %vm1154 = vcmp.lt.s32.totalorder %v1138, 32
    %vm1155 = vcmp.lt.s32.totalorder %v1139, 32
    %vm1156 = vcmp.lt.s32.totalorder %v1140, 32
    %vm1157 = vcmp.lt.s32.totalorder %v1141, 32
    %vm1158 = vcmp.lt.s32.totalorder %v1142, 32
    %vm1159 = vcmp.lt.s32.totalorder %v1143, 32
    %vm1160 = vmand %vm1144, %vm1152
    %vm1161 = vmand %vm1145, %vm1153
    %vm1162 = vmand %vm1146, %vm1154
    %vm1163 = vmand %vm1147, %vm1155
    %vm1164 = vmand %vm1148, %vm1156
    %vm1165 = vmand %vm1149, %vm1157
    %vm1166 = vmand %vm1150, %vm1158
    %vm1167 = vmand %vm1151, %vm1159
    %v1168 = vld [vmem:[#allocation2 + $0x47] sm:$0xff]
    %v1169 = vsel %vm1160, 1, 0
    %v1170 = vsel %vm1161, 1, 0
    %v1171 = vsel %vm1162, 1, 0
    %v1172 = vsel %vm1163, 1, 0
    %v1173 = vsel %vm1164, 1, 0
    %v1174 = vsel %vm1165, 1, 0
    %v1175 = vsel %vm1166, 1, 0
    %v1176 = vsel %vm1167, 1, 0
    %vm1177 = vcmp.eq.s32.totalorder %v1169, 1
    %vm1178 = vcmp.eq.s32.totalorder %v1170, 1
    %vm1179 = vcmp.eq.s32.totalorder %v1171, 1
    %vm1180 = vcmp.eq.s32.totalorder %v1172, 1
    %vm1181 = vcmp.eq.s32.totalorder %v1173, 1
    %vm1182 = vcmp.eq.s32.totalorder %v1174, 1
    %vm1183 = vcmp.eq.s32.totalorder %v1175, 1
    %vm1184 = vcmp.eq.s32.totalorder %v1176, 1
    %v1185 = vsel %vm1177, %v714, 0.0
    %v1186 = vsel %vm1178, %v715, 0.0
    %v1187 = vsel %vm1179, %v716, 0.0
    %v1188 = vsel %vm1180, %v717, 0.0
    %v1189 = vsel %vm1181, %v718, 0.0
    %v1190 = vsel %vm1182, %v719, 0.0
    %v1191 = vsel %vm1183, %v720, 0.0
    %v1192 = vsel %vm1184, %v1168, 0.0
    %v1193 = vadd.s32 %v225, 8
    %v1194 = vadd.s32 %v226, 8
    %v1195 = vadd.s32 %v227, 8
    %v1196 = vadd.s32 %v228, 8
    %v1197 = vadd.s32 %v229, 8
    %v1198 = vadd.s32 %v230, 8
    %v1199 = vadd.s32 %v231, 8
    %v1200 = vadd.s32 %v232, 8
    %vm1201 = vcmp.ge.s32.totalorder %v1193, 0
    %vm1202 = vcmp.ge.s32.totalorder %v1194, 0
    %vm1203 = vcmp.ge.s32.totalorder %v1195, 0
    %vm1204 = vcmp.ge.s32.totalorder %v1196, 0
    %vm1205 = vcmp.ge.s32.totalorder %v1197, 0
    %vm1206 = vcmp.ge.s32.totalorder %v1198, 0
    %vm1207 = vcmp.ge.s32.totalorder %v1199, 0
    %vm1208 = vcmp.ge.s32.totalorder %v1200, 0
    %vm1209 = vcmp.lt.s32.totalorder %v1193, 32
    %vm1210 = vcmp.lt.s32.totalorder %v1194, 32
    %vm1211 = vcmp.lt.s32.totalorder %v1195, 32
    %vm1212 = vcmp.lt.s32.totalorder %v1196, 32
    %vm1213 = vcmp.lt.s32.totalorder %v1197, 32
    %vm1214 = vcmp.lt.s32.totalorder %v1198, 32
    %vm1215 = vcmp.lt.s32.totalorder %v1199, 32
    %vm1216 = vcmp.lt.s32.totalorder %v1200, 32
    %vm1217 = vmand %vm1201, %vm1209
    %vm1218 = vmand %vm1202, %vm1210
    %vm1219 = vmand %vm1203, %vm1211
    %vm1220 = vmand %vm1204, %vm1212
    %vm1221 = vmand %vm1205, %vm1213
    %vm1222 = vmand %vm1206, %vm1214
    %vm1223 = vmand %vm1207, %vm1215
    %vm1224 = vmand %vm1208, %vm1216
    %v1225 = vld [vmem:[#allocation2 + $0x48] sm:$0xff]
    %v1226 = vsel %vm1217, 1, 0
    %v1227 = vsel %vm1218, 1, 0
    %v1228 = vsel %vm1219, 1, 0
    %v1229 = vsel %vm1220, 1, 0
    %v1230 = vsel %vm1221, 1, 0
    %v1231 = vsel %vm1222, 1, 0
    %v1232 = vsel %vm1223, 1, 0
    %v1233 = vsel %vm1224, 1, 0
    %vm1234 = vcmp.eq.s32.totalorder %v1226, 1
    %vm1235 = vcmp.eq.s32.totalorder %v1227, 1
    %vm1236 = vcmp.eq.s32.totalorder %v1228, 1
    %vm1237 = vcmp.eq.s32.totalorder %v1229, 1
    %vm1238 = vcmp.eq.s32.totalorder %v1230, 1
    %vm1239 = vcmp.eq.s32.totalorder %v1231, 1
    %vm1240 = vcmp.eq.s32.totalorder %v1232, 1
    %vm1241 = vcmp.eq.s32.totalorder %v1233, 1
    %v1242 = vsel %vm1234, %v267, 0.0
    %v1243 = vsel %vm1235, %v268, 0.0
    %v1244 = vsel %vm1236, %v269, 0.0
    %v1245 = vsel %vm1237, %v270, 0.0
    %v1246 = vsel %vm1238, %v271, 0.0
    %v1247 = vsel %vm1239, %v272, 0.0
    %v1248 = vsel %vm1240, %v769, 0.0
    %v1249 = vsel %vm1241, %v1225, 0.0
    %1258 = vrot.lane.b32.xlu0 %v353, 16
    %v1259 = vpop.permute.xlu0 %1258
    %1260 = vrot.lane.b32.xlu0 %v354, 16
    %v1261 = vpop.permute.xlu0 %1260
    %1262 = vrot.lane.b32.xlu0 %v355, 16
    %v1263 = vpop.permute.xlu0 %1262
    %1264 = vrot.lane.b32.xlu0 %v356, 16
    %v1265 = vpop.permute.xlu0 %1264
    %1266 = vrot.lane.b32.xlu0 %v357, 16
    %v1267 = vpop.permute.xlu0 %1266
    %1268 = vrot.lane.b32.xlu0 %v358, 16
    %v1269 = vpop.permute.xlu0 %1268
    %1270 = vrot.lane.b32.xlu0 %v359, 16
    %v1271 = vpop.permute.xlu0 %1270
    %1272 = vrot.lane.b32.xlu0 %v360, 16
    %v1273 = vpop.permute.xlu0 %1272
    %1290 = vrot.lane.b32.xlu0 %v417, 32
    %v1291 = vpop.permute.xlu0 %1290
    %1292 = vrot.lane.b32.xlu0 %v418, 32
    %v1293 = vpop.permute.xlu0 %1292
    %1294 = vrot.lane.b32.xlu0 %v419, 32
    %v1295 = vpop.permute.xlu0 %1294
    %1296 = vrot.lane.b32.xlu0 %v420, 32
    %v1297 = vpop.permute.xlu0 %1296
    %1298 = vrot.lane.b32.xlu0 %v421, 32
    %v1299 = vpop.permute.xlu0 %1298
    %1300 = vrot.lane.b32.xlu0 %v422, 32
    %v1301 = vpop.permute.xlu0 %1300
    %1302 = vrot.lane.b32.xlu0 %v423, 32
    %v1303 = vpop.permute.xlu0 %1302
    %1304 = vrot.lane.b32.xlu0 %v424, 32
    %v1305 = vpop.permute.xlu0 %1304
    %1322 = vrot.lane.b32.xlu0 %v481, 48
    %v1323 = vpop.permute.xlu0 %1322
    %1324 = vrot.lane.b32.xlu0 %v482, 48
    %v1325 = vpop.permute.xlu0 %1324
    %1326 = vrot.lane.b32.xlu0 %v483, 48
    %v1327 = vpop.permute.xlu0 %1326
    %1328 = vrot.lane.b32.xlu0 %v484, 48
    %v1329 = vpop.permute.xlu0 %1328
    %1330 = vrot.lane.b32.xlu0 %v485, 48
    %v1331 = vpop.permute.xlu0 %1330
    %1332 = vrot.lane.b32.xlu0 %v486, 48
    %v1333 = vpop.permute.xlu0 %1332
    %1334 = vrot.lane.b32.xlu0 %v487, 48
    %v1335 = vpop.permute.xlu0 %1334
    %1336 = vrot.lane.b32.xlu0 %v488, 48
    %v1337 = vpop.permute.xlu0 %1336
    %1354 = vrot.lane.b32.xlu0 %v545, 64
    %v1355 = vpop.permute.xlu0 %1354
    %1356 = vrot.lane.b32.xlu0 %v546, 64
    %v1357 = vpop.permute.xlu0 %1356
    %1358 = vrot.lane.b32.xlu0 %v547, 64
    %v1359 = vpop.permute.xlu0 %1358
    %1360 = vrot.lane.b32.xlu0 %v548, 64
    %v1361 = vpop.permute.xlu0 %1360
    %1362 = vrot.lane.b32.xlu0 %v549, 64
    %v1363 = vpop.permute.xlu0 %1362
    %1364 = vrot.lane.b32.xlu0 %v550, 64
    %v1365 = vpop.permute.xlu0 %1364
    %1366 = vrot.lane.b32.xlu0 %v551, 64
    %v1367 = vpop.permute.xlu0 %1366
    %1368 = vrot.lane.b32.xlu0 %v552, 64
    %v1369 = vpop.permute.xlu0 %1368
    %1386 = vrot.lane.b32.xlu0 %v609, 80
    %v1387 = vpop.permute.xlu0 %1386
    %1388 = vrot.lane.b32.xlu0 %v610, 80
    %v1389 = vpop.permute.xlu0 %1388
    %1390 = vrot.lane.b32.xlu0 %v611, 80
    %v1391 = vpop.permute.xlu0 %1390
    %1392 = vrot.lane.b32.xlu0 %v612, 80
    %v1393 = vpop.permute.xlu0 %1392
    %1394 = vrot.lane.b32.xlu0 %v613, 80
    %v1395 = vpop.permute.xlu0 %1394
    %1396 = vrot.lane.b32.xlu0 %v614, 80
    %v1397 = vpop.permute.xlu0 %1396
    %1398 = vrot.lane.b32.xlu0 %v615, 80
    %v1399 = vpop.permute.xlu0 %1398
    %1400 = vrot.lane.b32.xlu0 %v616, 80
    %v1401 = vpop.permute.xlu0 %1400
    %1418 = vrot.lane.b32.xlu0 %v673, 96
    %v1419 = vpop.permute.xlu0 %1418
    %1420 = vrot.lane.b32.xlu0 %v674, 96
    %v1421 = vpop.permute.xlu0 %1420
    %1422 = vrot.lane.b32.xlu0 %v675, 96
    %v1423 = vpop.permute.xlu0 %1422
    %1424 = vrot.lane.b32.xlu0 %v676, 96
    %v1425 = vpop.permute.xlu0 %1424
    %1426 = vrot.lane.b32.xlu0 %v677, 96
    %v1427 = vpop.permute.xlu0 %1426
    %1428 = vrot.lane.b32.xlu0 %v678, 96
    %v1429 = vpop.permute.xlu0 %1428
    %1430 = vrot.lane.b32.xlu0 %v679, 96
    %v1431 = vpop.permute.xlu0 %1430
    %1432 = vrot.lane.b32.xlu0 %v680, 96
    %v1433 = vpop.permute.xlu0 %1432
    %1450 = vrot.lane.b32.xlu0 %v737, 112
    %v1451 = vpop.permute.xlu0 %1450
    %1452 = vrot.lane.b32.xlu0 %v738, 112
    %v1453 = vpop.permute.xlu0 %1452
    %1454 = vrot.lane.b32.xlu0 %v739, 112
    %v1455 = vpop.permute.xlu0 %1454
    %1456 = vrot.lane.b32.xlu0 %v740, 112
    %v1457 = vpop.permute.xlu0 %1456
    %1458 = vrot.lane.b32.xlu0 %v741, 112
    %v1459 = vpop.permute.xlu0 %1458
    %1460 = vrot.lane.b32.xlu0 %v742, 112
    %v1461 = vpop.permute.xlu0 %1460
    %1462 = vrot.lane.b32.xlu0 %v743, 112
    %v1463 = vpop.permute.xlu0 %1462
    %1464 = vrot.lane.b32.xlu0 %v744, 112
    %v1465 = vpop.permute.xlu0 %1464
    %1482 = vrot.lane.b32.xlu0 %v843, 16
    %v1483 = vpop.permute.xlu0 %1482
    %1484 = vrot.lane.b32.xlu0 %v844, 16
    %v1485 = vpop.permute.xlu0 %1484
    %1486 = vrot.lane.b32.xlu0 %v845, 16
    %v1487 = vpop.permute.xlu0 %1486
    %1488 = vrot.lane.b32.xlu0 %v846, 16
    %v1489 = vpop.permute.xlu0 %1488
    %1490 = vrot.lane.b32.xlu0 %v847, 16
    %v1491 = vpop.permute.xlu0 %1490
    %1492 = vrot.lane.b32.xlu0 %v848, 16
    %v1493 = vpop.permute.xlu0 %1492
    %1494 = vrot.lane.b32.xlu0 %v849, 16
    %v1495 = vpop.permute.xlu0 %1494
    %1496 = vrot.lane.b32.xlu0 %v850, 16
    %v1497 = vpop.permute.xlu0 %1496
    %1514 = vrot.lane.b32.xlu0 %v900, 32
    %v1515 = vpop.permute.xlu0 %1514
    %1516 = vrot.lane.b32.xlu0 %v901, 32
    %v1517 = vpop.permute.xlu0 %1516
    %1518 = vrot.lane.b32.xlu0 %v902, 32
    %v1519 = vpop.permute.xlu0 %1518
    %1520 = vrot.lane.b32.xlu0 %v903, 32
    %v1521 = vpop.permute.xlu0 %1520
    %1522 = vrot.lane.b32.xlu0 %v904, 32
    %v1523 = vpop.permute.xlu0 %1522
    %1524 = vrot.lane.b32.xlu0 %v905, 32
    %v1525 = vpop.permute.xlu0 %1524
    %1526 = vrot.lane.b32.xlu0 %v906, 32
    %v1527 = vpop.permute.xlu0 %1526
    %1528 = vrot.lane.b32.xlu0 %v907, 32
    %v1529 = vpop.permute.xlu0 %1528
    %1546 = vrot.lane.b32.xlu0 %v957, 48
    %v1547 = vpop.permute.xlu0 %1546
    %1548 = vrot.lane.b32.xlu0 %v958, 48
    %v1549 = vpop.permute.xlu0 %1548
    %1550 = vrot.lane.b32.xlu0 %v959, 48
    %v1551 = vpop.permute.xlu0 %1550
    %1552 = vrot.lane.b32.xlu0 %v960, 48
    %v1553 = vpop.permute.xlu0 %1552
    %1554 = vrot.lane.b32.xlu0 %v961, 48
    %v1555 = vpop.permute.xlu0 %1554
    %1556 = vrot.lane.b32.xlu0 %v962, 48
    %v1557 = vpop.permute.xlu0 %1556
    %1558 = vrot.lane.b32.xlu0 %v963, 48
    %v1559 = vpop.permute.xlu0 %1558
    %1560 = vrot.lane.b32.xlu0 %v964, 48
    %v1561 = vpop.permute.xlu0 %1560
    %1578 = vrot.lane.b32.xlu0 %v1014, 64
    %v1579 = vpop.permute.xlu0 %1578
    %1580 = vrot.lane.b32.xlu0 %v1015, 64
    %v1581 = vpop.permute.xlu0 %1580
    %1582 = vrot.lane.b32.xlu0 %v1016, 64
    %v1583 = vpop.permute.xlu0 %1582
    %1584 = vrot.lane.b32.xlu0 %v1017, 64
    %v1585 = vpop.permute.xlu0 %1584
    %1586 = vrot.lane.b32.xlu0 %v1018, 64
    %v1587 = vpop.permute.xlu0 %1586
    %1588 = vrot.lane.b32.xlu0 %v1019, 64
    %v1589 = vpop.permute.xlu0 %1588
    %1590 = vrot.lane.b32.xlu0 %v1020, 64
    %v1591 = vpop.permute.xlu0 %1590
    %1592 = vrot.lane.b32.xlu0 %v1021, 64
    %v1593 = vpop.permute.xlu0 %1592
    %1610 = vrot.lane.b32.xlu0 %v1071, 80
    %v1611 = vpop.permute.xlu0 %1610
    %1612 = vrot.lane.b32.xlu0 %v1072, 80
    %v1613 = vpop.permute.xlu0 %1612
    %1614 = vrot.lane.b32.xlu0 %v1073, 80
    %v1615 = vpop.permute.xlu0 %1614
    %1616 = vrot.lane.b32.xlu0 %v1074, 80
    %v1617 = vpop.permute.xlu0 %1616
    %1618 = vrot.lane.b32.xlu0 %v1075, 80
    %v1619 = vpop.permute.xlu0 %1618
    %1620 = vrot.lane.b32.xlu0 %v1076, 80
    %v1621 = vpop.permute.xlu0 %1620
    %1622 = vrot.lane.b32.xlu0 %v1077, 80
    %v1623 = vpop.permute.xlu0 %1622
    %1624 = vrot.lane.b32.xlu0 %v1078, 80
    %v1625 = vpop.permute.xlu0 %1624
    %1642 = vrot.lane.b32.xlu0 %v1128, 96
    %v1643 = vpop.permute.xlu0 %1642
    %1644 = vrot.lane.b32.xlu0 %v1129, 96
    %v1645 = vpop.permute.xlu0 %1644
    %1646 = vrot.lane.b32.xlu0 %v1130, 96
    %v1647 = vpop.permute.xlu0 %1646
    %1648 = vrot.lane.b32.xlu0 %v1131, 96
    %v1649 = vpop.permute.xlu0 %1648
    %1650 = vrot.lane.b32.xlu0 %v1132, 96
    %v1651 = vpop.permute.xlu0 %1650
    %1652 = vrot.lane.b32.xlu0 %v1133, 96
    %v1653 = vpop.permute.xlu0 %1652
    %1654 = vrot.lane.b32.xlu0 %v1134, 96
    %v1655 = vpop.permute.xlu0 %1654
    %1656 = vrot.lane.b32.xlu0 %v1135, 96
    %v1657 = vpop.permute.xlu0 %1656
    %1674 = vrot.lane.b32.xlu0 %v1185, 112
    %v1675 = vpop.permute.xlu0 %1674
    %1676 = vrot.lane.b32.xlu0 %v1186, 112
    %v1677 = vpop.permute.xlu0 %1676
    %1678 = vrot.lane.b32.xlu0 %v1187, 112
    %v1679 = vpop.permute.xlu0 %1678
    %1680 = vrot.lane.b32.xlu0 %v1188, 112
    %v1681 = vpop.permute.xlu0 %1680
    %1682 = vrot.lane.b32.xlu0 %v1189, 112
    %v1683 = vpop.permute.xlu0 %1682
    %1684 = vrot.lane.b32.xlu0 %v1190, 112
    %v1685 = vpop.permute.xlu0 %1684
    %1686 = vrot.lane.b32.xlu0 %v1191, 112
    %v1687 = vpop.permute.xlu0 %1686
    %1688 = vrot.lane.b32.xlu0 %v1192, 112
    %v1689 = vpop.permute.xlu0 %1688
    %v1698 = vsel %vm61, %v289, %v1259
    %v1699 = vsel %vm61, %v290, %v1261
    %v1700 = vsel %vm61, %v291, %v1263
    %v1701 = vsel %vm61, %v292, %v1265
    %v1702 = vsel %vm61, %v293, %v1267
    %v1703 = vsel %vm61, %v294, %v1269
    %v1704 = vsel %vm61, %v295, %v1271
    %v1705 = vsel %vm61, %v296, %v1273
    %vm1706 = vcmask 261120
    %v1707 = vsel %vm1706, %v1698, %v1291
    %v1708 = vsel %vm1706, %v1699, %v1293
    %v1709 = vsel %vm1706, %v1700, %v1295
    %v1710 = vsel %vm1706, %v1701, %v1297
    %v1711 = vsel %vm1706, %v1702, %v1299
    %v1712 = vsel %vm1706, %v1703, %v1301
    %v1713 = vsel %vm1706, %v1704, %v1303
    %v1714 = vsel %vm1706, %v1705, %v1305
    %vm1715 = vcmask 392192
    %v1716 = vsel %vm1715, %v1707, %v1323
    %v1717 = vsel %vm1715, %v1708, %v1325
    %v1718 = vsel %vm1715, %v1709, %v1327
    %v1719 = vsel %vm1715, %v1710, %v1329
    %v1720 = vsel %vm1715, %v1711, %v1331
    %v1721 = vsel %vm1715, %v1712, %v1333
    %v1722 = vsel %vm1715, %v1713, %v1335
    %v1723 = vsel %vm1715, %v1714, %v1337
    %vm1724 = vcmask 523264
    %v1725 = vsel %vm1724, %v1716, %v1355
    %v1726 = vsel %vm1724, %v1717, %v1357
    %v1727 = vsel %vm1724, %v1718, %v1359
    %v1728 = vsel %vm1724, %v1719, %v1361
    %v1729 = vsel %vm1724, %v1720, %v1363
    %v1730 = vsel %vm1724, %v1721, %v1365
    %v1731 = vsel %vm1724, %v1722, %v1367
    %v1732 = vsel %vm1724, %v1723, %v1369
    %vm1733 = vcmask 654336
    %v1734 = vsel %vm1733, %v1725, %v1387
    %v1735 = vsel %vm1733, %v1726, %v1389
    %v1736 = vsel %vm1733, %v1727, %v1391
    %v1737 = vsel %vm1733, %v1728, %v1393
    %v1738 = vsel %vm1733, %v1729, %v1395
    %v1739 = vsel %vm1733, %v1730, %v1397
    %v1740 = vsel %vm1733, %v1731, %v1399
    %v1741 = vsel %vm1733, %v1732, %v1401
    %vm1742 = vcmask 785408
    %v1743 = vsel %vm1742, %v1734, %v1419
    %v1744 = vsel %vm1742, %v1735, %v1421
    %v1745 = vsel %vm1742, %v1736, %v1423
    %v1746 = vsel %vm1742, %v1737, %v1425
    %v1747 = vsel %vm1742, %v1738, %v1427
    %v1748 = vsel %vm1742, %v1739, %v1429
    %v1749 = vsel %vm1742, %v1740, %v1431
    %v1750 = vsel %vm1742, %v1741, %v1433
    %vm1751 = vcmask 916480
    %v1752 = vsel %vm1751, %v1743, %v1451
    %v1753 = vsel %vm1751, %v1744, %v1453
    %v1754 = vsel %vm1751, %v1745, %v1455
    %v1755 = vsel %vm1751, %v1746, %v1457
    %v1756 = vsel %vm1751, %v1747, %v1459
    %v1757 = vsel %vm1751, %v1748, %v1461
    %v1758 = vsel %vm1751, %v1749, %v1463
    %v1759 = vsel %vm1751, %v1750, %v1465
    %v1760 = vsel %vm61, %v786, %v1483
    %v1761 = vsel %vm61, %v787, %v1485
    %v1762 = vsel %vm61, %v788, %v1487
    %v1763 = vsel %vm61, %v789, %v1489
    %v1764 = vsel %vm61, %v790, %v1491
    %v1765 = vsel %vm61, %v791, %v1493
    %v1766 = vsel %vm61, %v792, %v1495
    %v1767 = vsel %vm61, %v793, %v1497
    %v1768 = vsel %vm1706, %v1760, %v1515
    %v1769 = vsel %vm1706, %v1761, %v1517
    %v1770 = vsel %vm1706, %v1762, %v1519
    %v1771 = vsel %vm1706, %v1763, %v1521
    %v1772 = vsel %vm1706, %v1764, %v1523
    %v1773 = vsel %vm1706, %v1765, %v1525
    %v1774 = vsel %vm1706, %v1766, %v1527
    %v1775 = vsel %vm1706, %v1767, %v1529
    %v1776 = vsel %vm1715, %v1768, %v1547
    %v1777 = vsel %vm1715, %v1769, %v1549
    %v1778 = vsel %vm1715, %v1770, %v1551
    %v1779 = vsel %vm1715, %v1771, %v1553
    %v1780 = vsel %vm1715, %v1772, %v1555
    %v1781 = vsel %vm1715, %v1773, %v1557
    %v1782 = vsel %vm1715, %v1774, %v1559
    %v1783 = vsel %vm1715, %v1775, %v1561
    %v1784 = vsel %vm1724, %v1776, %v1579
    %v1785 = vsel %vm1724, %v1777, %v1581
    %v1786 = vsel %vm1724, %v1778, %v1583
    %v1787 = vsel %vm1724, %v1779, %v1585
    %v1788 = vsel %vm1724, %v1780, %v1587
    %v1789 = vsel %vm1724, %v1781, %v1589
    %v1790 = vsel %vm1724, %v1782, %v1591
    %v1791 = vsel %vm1724, %v1783, %v1593
    %v1792 = vsel %vm1733, %v1784, %v1611
    %v1793 = vsel %vm1733, %v1785, %v1613
    %v1794 = vsel %vm1733, %v1786, %v1615
    %v1795 = vsel %vm1733, %v1787, %v1617
    %v1796 = vsel %vm1733, %v1788, %v1619
    %v1797 = vsel %vm1733, %v1789, %v1621
    %v1798 = vsel %vm1733, %v1790, %v1623
    %v1799 = vsel %vm1733, %v1791, %v1625
    %v1800 = vsel %vm1742, %v1792, %v1643
    %v1801 = vsel %vm1742, %v1793, %v1645
    %v1802 = vsel %vm1742, %v1794, %v1647
    %v1803 = vsel %vm1742, %v1795, %v1649
    %v1804 = vsel %vm1742, %v1796, %v1651
    %v1805 = vsel %vm1742, %v1797, %v1653
    %v1806 = vsel %vm1742, %v1798, %v1655
    %v1807 = vsel %vm1742, %v1799, %v1657
    %v1808 = vsel %vm1751, %v1800, %v1675
    %v1809 = vsel %vm1751, %v1801, %v1677
    %v1810 = vsel %vm1751, %v1802, %v1679
    %v1811 = vsel %vm1751, %v1803, %v1681
    %v1812 = vsel %vm1751, %v1804, %v1683
    %v1813 = vsel %vm1751, %v1805, %v1685
    %v1814 = vsel %vm1751, %v1806, %v1687
    %v1815 = vsel %vm1751, %v1807, %v1689
    %v1816 = vpack.c.bf16 %v1753, %v1752
    %v1817 = vpack.c.bf16 %v1809, %v1808
    %v1818 = vpack.c.bf16 %v1243, %v1242
    %v1819 = vpack.c.bf16 %v1755, %v1754
    %v1820 = vpack.c.bf16 %v1811, %v1810
    %v1821 = vpack.c.bf16 %v1245, %v1244
    %v1822 = vpack.c.bf16 %v1757, %v1756
    %v1823 = vpack.c.bf16 %v1813, %v1812
    %v1824 = vpack.c.bf16 %v1247, %v1246
    %v1825 = vpack.c.bf16 %v1759, %v1758
    %v1826 = vpack.c.bf16 %v1815, %v1814
    %v1827 = vpack.c.bf16 %v1249, %v1248
    %v1828 = vld [vmem:[#allocation6] sm:$0xf]
    %v1829 = vld [vmem:[#allocation6 + $0x4] sm:$0xf]
    %v1830 = vld [vmem:[#allocation6 + $0x8] sm:$0xf]
    %v1831 = vld [vmem:[#allocation6 + $0xc] sm:$0xf]
    %v1832 = vld [vmem:[#allocation6 + $0x10] sm:$0xf]
    %v1833 = vld [vmem:[#allocation6 + $0x14] sm:$0xf]
    %v1834 = vld [vmem:[#allocation6 + $0x18] sm:$0xf]
    %v1835 = vld [vmem:[#allocation6 + $0x1c] sm:$0xf]
    %v1836 = vld [vmem:[#allocation6 + $0x20] sm:$0xf]
    %v1837 = vld [vmem:[#allocation6 + $0x24] sm:$0xf]
    %v1838 = vld [vmem:[#allocation6 + $0x28] sm:$0xf]
    %v1839 = vld [vmem:[#allocation6 + $0x2c] sm:$0xf]
    %v1840 = vld [vmem:[#allocation6 + $0x30] sm:$0xf]
    %v1841 = vld [vmem:[#allocation6 + $0x34] sm:$0xf]
    %v1842 = vld [vmem:[#allocation6 + $0x38] sm:$0xf]
    %v1843 = vld [vmem:[#allocation6 + $0x3c] sm:$0xf]
    %v1844 = vld [vmem:[#allocation6 + $0x40] sm:$0xf]
    %v1845 = vld [vmem:[#allocation6 + $0x44] sm:$0xf]
    %v1846 = vld [vmem:[#allocation6 + $0x48] sm:$0xf]
    %v1847 = vld [vmem:[#allocation6 + $0x4c] sm:$0xf]
    %v1848 = vld [vmem:[#allocation6 + $0x50] sm:$0xf]
    %v1849 = vld [vmem:[#allocation6 + $0x54] sm:$0xf]
    %v1850 = vld [vmem:[#allocation6 + $0x58] sm:$0xf]
    %v1851 = vld [vmem:[#allocation6 + $0x5c] sm:$0xf]
    %v1852 = vld [vmem:[#allocation6 + $0x60] sm:$0xf]
    %v1853 = vld [vmem:[#allocation6 + $0x64] sm:$0xf]
    %v1854 = vld [vmem:[#allocation6 + $0x68] sm:$0xf]
    %v1855 = vld [vmem:[#allocation6 + $0x6c] sm:$0xf]
    %v1856 = vld [vmem:[#allocation6 + $0x70] sm:$0xf]
    %v1857 = vld [vmem:[#allocation6 + $0x74] sm:$0xf]
    %v1858 = vld [vmem:[#allocation6 + $0x78] sm:$0xf]
    %v1859 = vld [vmem:[#allocation6 + $0x7c] sm:$0xf]
    %v1860 = vld [vmem:[#allocation6 + $0x80] sm:$0xf]
    %v1861 = vld [vmem:[#allocation6 + $0x84] sm:$0xf]
    %v1862 = vlaneseq
    %v1863 = vshrl.u32 %v1862, 7
    %v1864 = vsub.s32 0, %v1863
    %v1865 = vrot.slane %v50, %v1864
    %v1900 = vunpack.c.l.b16 %v1828
    %v1901 = vunpack.c.l.b16 %v1829
    %v1902 = vunpack.c.l.b16 %v1830
    %v1903 = vunpack.c.l.b16 %v1831
    %v1904 = vunpack.c.l.b16 %v1832
    %v1905 = vunpack.c.l.b16 %v1833
    %v1906 = vunpack.c.l.b16 %v1834
    %v1907 = vunpack.c.l.b16 %v1835
    %v1908 = vunpack.c.l.b16 %v1836
    %v1909 = vunpack.c.l.b16 %v1837
    %v1910 = vunpack.c.l.b16 %v1838
    %v1911 = vunpack.c.l.b16 %v1839
    %v1912 = vunpack.c.l.b16 %v1840
    %v1913 = vunpack.c.l.b16 %v1841
    %v1914 = vunpack.c.l.b16 %v1842
    %v1915 = vunpack.c.l.b16 %v1843
    %v1916 = vunpack.c.l.b16 %v1844
    %v1917 = vunpack.c.l.b16 %v1845
    %v1918 = vunpack.c.l.b16 %v1846
    %v1919 = vunpack.c.l.b16 %v1847
    %v1920 = vunpack.c.l.b16 %v1848
    %v1921 = vunpack.c.l.b16 %v1849
    %v1922 = vunpack.c.l.b16 %v1850
    %v1923 = vunpack.c.l.b16 %v1851
    %v1924 = vunpack.c.l.b16 %v1852
    %v1925 = vunpack.c.l.b16 %v1853
    %v1926 = vunpack.c.l.b16 %v1854
    %v1927 = vunpack.c.l.b16 %v1855
    %v1928 = vunpack.c.l.b16 %v1856
    %v1929 = vunpack.c.l.b16 %v1857
    %v1930 = vunpack.c.l.b16 %v1858
    %v1931 = vunpack.c.l.b16 %v1859
    %v1932 = vunpack.c.l.b16 %v1860
    %v1933 = vunpack.c.l.b16 %v1861
    %v1934 = vpack.c.b16 %v1901, %v1900
    %v1935 = vpack.c.b16 %v1903, %v1902
    %v1936 = vpack.c.b16 %v1905, %v1904
    %v1937 = vpack.c.b16 %v1907, %v1906
    %v1938 = vpack.c.b16 %v1909, %v1908
    %v1939 = vpack.c.b16 %v1911, %v1910
    %v1940 = vpack.c.b16 %v1913, %v1912
    %v1941 = vpack.c.b16 %v1915, %v1914
    %v1942 = vpack.c.b16 %v1917, %v1916
    %v1943 = vpack.c.b16 %v1919, %v1918
    %v1944 = vpack.c.b16 %v1921, %v1920
    %v1945 = vpack.c.b16 %v1923, %v1922
    %v1946 = vpack.c.b16 %v1925, %v1924
    %v1947 = vpack.c.b16 %v1927, %v1926
    %v1948 = vpack.c.b16 %v1929, %v1928
    %v1949 = vpack.c.b16 %v1931, %v1930
    %v1950 = vpack.c.b16 %v1933, %v1932
    %v1969 = vsel %vm61, %v1818, 0
    %v1972 = vsel %vm61, %v1821, 0
    %v1975 = vsel %vm61, %v1824, 0
    %v1978 = vsel %vm61, %v1827, 0
    %1980 = vmatprep.subr.bf16.mxu0 0
    %1981 = vmatpush1.bf16.msra.mxu0 %v1934
    %1982 = vmatprep.subr.bf16.mxu0 0
    %1983 = vmatpush1.bf16.msra.mxu0 %v1935
    %1984 = vmatprep.subr.bf16.mxu0 0
    %1985 = vmatpush1.bf16.msra.mxu0 %v1936
    %1986 = vmatprep.subr.bf16.mxu0 0
    %1987 = vmatpush1.bf16.msra.mxu0 %v1937
    %1988 = vmatprep.subr.bf16.mxu0 0
    %1989 = vmatpush1.bf16.msra.mxu0 %v1938
    %1990 = vmatprep.subr.bf16.mxu0 0
    %1991 = vmatpush1.bf16.msra.mxu0 %v1939
    %1992 = vmatprep.subr.bf16.mxu0 0
    %1993 = vmatpush1.bf16.msra.mxu0 %v1940
    %1994 = vmatprep.subr.bf16.mxu0 0
    %1995 = vmatpush1.bf16.msra.mxu0 %v1941
    %1996 = vmatprep.subr.bf16.mxu0 0
    %1997 = vmatpush1.bf16.msra.mxu0 %v1942
    %1998 = vmatprep.subr.bf16.mxu0 0
    %1999 = vmatpush1.bf16.msra.mxu0 %v1943
    %2000 = vmatprep.subr.bf16.mxu0 0
    %2001 = vmatpush1.bf16.msra.mxu0 %v1944
    %2002 = vmatprep.subr.bf16.mxu0 0
    %2003 = vmatpush1.bf16.msra.mxu0 %v1945
    %2004 = vmatprep.subr.bf16.mxu0 0
    %2005 = vmatpush1.bf16.msra.mxu0 %v1946
    %2006 = vmatprep.subr.bf16.mxu0 0
    %2007 = vmatpush1.bf16.msra.mxu0 %v1947
    %2008 = vmatprep.subr.bf16.mxu0 0
    %2009 = vmatpush1.bf16.msra.mxu0 %v1948
    %2010 = vmatprep.subr.bf16.mxu0 0
    %2011 = vmatpush1.bf16.msra.mxu0 %v1949
    %2012 = vmatprep.mubr.bf16.mxu0 %v1817
    %2013 = vmatmul.mubr.bf16.gmra.mrb[0].mxu0 %v1816
    %v2014 = vpop.f32.mrb[0].mxu0
    %v2015 = vadd.f32 %v1865, %v2014
    %v2016 = vpop.f32.mrb[0].mxu0
    %v2017 = vpop.f32.mrb[0].mxu0
    %v2018 = vadd.f32 %v1865, %v2017
    %v2019 = vpop.f32.mrb[0].mxu0
    %2020 = vmatprep.mubr.bf16.mxu0 %v1820
    %2021 = vmatmul.mubr.bf16.gmra.mrb[0].mxu0 %v1819
    %v2022 = vpop.f32.mrb[0].mxu0
    %v2023 = vadd.f32 %v1865, %v2022
    %v2024 = vpop.f32.mrb[0].mxu0
    %v2025 = vpop.f32.mrb[0].mxu0
    %v2026 = vadd.f32 %v1865, %v2025
    %v2027 = vpop.f32.mrb[0].mxu0
    %2028 = vmatprep.mubr.bf16.mxu0 %v1823
    %2029 = vmatmul.mubr.bf16.gmra.mrb[0].mxu0 %v1822
    %v2030 = vpop.f32.mrb[0].mxu0
    %v2031 = vadd.f32 %v1865, %v2030
    %v2032 = vpop.f32.mrb[0].mxu0
    %v2033 = vpop.f32.mrb[0].mxu0
    %v2034 = vadd.f32 %v1865, %v2033
    %v2035 = vpop.f32.mrb[0].mxu0
    %2036 = vmatprep.mubr.bf16.mxu0 %v1826
    %2037 = vmatmul.mubr.bf16.gmra.mrb[0].mxu0 %v1825
    %v2038 = vpop.f32.mrb[0].mxu0
    %v2039 = vadd.f32 %v1865, %v2038
    %v2040 = vpop.f32.mrb[0].mxu0
    %v2041 = vpop.f32.mrb[0].mxu0
    %v2042 = vadd.f32 %v1865, %v2041
    %v2043 = vpop.f32.mrb[0].mxu0
    %2044 = vdwg.mxu0
    %2045 = vmatprep.subr.bf16.mxu0 0
    %2046 = vmatpush1.bf16.msra.mxu0 %v1950
    %2047 = vmatprep.subr.bf16.mxu0 0
    %2048 = vmatpush1.bf16.msra.mxu0 0
    %2049 = vmatprep.subr.bf16.mxu0 0
    %2050 = vmatpush1.bf16.msra.mxu0 0
    %2051 = vmatprep.subr.bf16.mxu0 0
    %2052 = vmatpush1.bf16.msra.mxu0 0
    %2053 = vmatprep.subr.bf16.mxu0 0
    %2054 = vmatpush1.bf16.msra.mxu0 0
    %2055 = vmatprep.subr.bf16.mxu0 0
    %2056 = vmatpush1.bf16.msra.mxu0 0
    %2057 = vmatprep.subr.bf16.mxu0 0
    %2058 = vmatpush1.bf16.msra.mxu0 0
    %2059 = vmatprep.subr.bf16.mxu0 0
    %2060 = vmatpush1.bf16.msra.mxu0 0
    %2061 = vmatprep.subr.bf16.mxu0 0
    %2062 = vmatpush1.bf16.msra.mxu0 0
    %2063 = vmatprep.subr.bf16.mxu0 0
    %2064 = vmatpush1.bf16.msra.mxu0 0
    %2065 = vmatprep.subr.bf16.mxu0 0
    %2066 = vmatpush1.bf16.msra.mxu0 0
    %2067 = vmatprep.subr.bf16.mxu0 0
    %2068 = vmatpush1.bf16.msra.mxu0 0
    %2069 = vmatprep.subr.bf16.mxu0 0
    %2070 = vmatpush1.bf16.msra.mxu0 0
    %2071 = vmatprep.subr.bf16.mxu0 0
    %2072 = vmatpush1.bf16.msra.mxu0 0
    %2073 = vmatprep.subr.bf16.mxu0 0
    %2074 = vmatpush1.bf16.msra.mxu0 0
    %2075 = vmatprep.subr.bf16.mxu0 0
    %2076 = vmatpush1.bf16.msra.mxu0 0
    %2077 = vmatprep.mubr.bf16.mxu0 0
    %2078 = vmatmul.mubr.bf16.gmra.mrb[0].mxu0 %v1969
    %v2079 = vpop.f32.mrb[0].mxu0
    %v2080 = vadd.f32 %v2015, %v2079
    %v2081 = vpop.f32.mrb[0].mxu0
    %v2082 = vpop.f32.mrb[0].mxu0
    %v2083 = vadd.f32 %v2018, %v2082
    %v2084 = vpop.f32.mrb[0].mxu0
    %2085 = vmatprep.mubr.bf16.mxu0 0
    %2086 = vmatmul.mubr.bf16.gmra.mrb[0].mxu0 %v1972
    %v2087 = vpop.f32.mrb[0].mxu0
    %v2088 = vadd.f32 %v2023, %v2087
    %v2089 = vpop.f32.mrb[0].mxu0
    %v2090 = vpop.f32.mrb[0].mxu0
    %v2091 = vadd.f32 %v2026, %v2090
    %v2092 = vpop.f32.mrb[0].mxu0
    %2093 = vmatprep.mubr.bf16.mxu0 0
    %2094 = vmatmul.mubr.bf16.gmra.mrb[0].mxu0 %v1975
    %v2095 = vpop.f32.mrb[0].mxu0
    %v2096 = vadd.f32 %v2031, %v2095
    %v2097 = vpop.f32.mrb[0].mxu0
    %v2098 = vpop.f32.mrb[0].mxu0
    %v2099 = vadd.f32 %v2034, %v2098
    %v2100 = vpop.f32.mrb[0].mxu0
    %2101 = vmatprep.mubr.bf16.mxu0 0
    %2102 = vmatmul.mubr.bf16.gmra.mrb[0].mxu0 %v1978
    %v2103 = vpop.f32.mrb[0].mxu0
    %v2104 = vadd.f32 %v2039, %v2103
    %v2105 = vpop.f32.mrb[0].mxu0
    %v2106 = vpop.f32.mrb[0].mxu0
    %v2107 = vadd.f32 %v2042, %v2106
    %v2108 = vpop.f32.mrb[0].mxu0
    %2109 = vdwg.mxu0
    %v2110 = vmax.f32 %v2080, 0.0
    %v2111 = vmax.f32 %v2083, 0.0
    %v2112 = vmax.f32 %v2088, 0.0
    %v2113 = vmax.f32 %v2091, 0.0
    %v2114 = vmax.f32 %v2096, 0.0
    %v2115 = vmax.f32 %v2099, 0.0
    %v2116 = vmax.f32 %v2104, 0.0
    %v2117 = vmax.f32 %v2107, 0.0
    %v2118 = vlaneseq
    %v2119 = vand.u32 %v2118, 127
    %v2120 = vmul.u32 %v202, 32
    %vm2121 = vcmp.ge.s32.totalorder %v2119, %v2120
    %v2122 = vadd.s32 %v2120, 32
    %vm2123 = vcmp.lt.s32.totalorder %v2119, %v2122
    %vm2124 = vmand %vm2121, %vm2123
    %v2125 = vsel %vm2124, 0.03125, 0.0
    %v2127 = vsel %vm1724, %v2125, 0
    %2129 = vmatprep.subr.mxu0 0.0
    %2130 = vmatpush1.msra.mxu0 %v2110
    %2131 = vmatprep.subr.mxu0 0.0
    %2132 = vmatpush1.msra.mxu0 %v2111
    %2133 = vmatprep.subr.mxu0 0.0
    %2134 = vmatpush1.msra.mxu0 %v2112
    %2135 = vmatprep.subr.mxu0 0.0
    %2136 = vmatpush1.msra.mxu0 %v2113
    %2137 = vmatprep.subr.mxu0 0.0
    %2138 = vmatpush1.msra.mxu0 %v2114
    %2139 = vmatprep.subr.mxu0 0.0
    %2140 = vmatpush1.msra.mxu0 %v2115
    %2141 = vmatprep.subr.mxu0 0.0
    %2142 = vmatpush1.msra.mxu0 %v2116
    %2143 = vmatprep.subr.mxu0 0.0
    %2144 = vmatpush1.msra.mxu0 %v2117
    %2145 = vmatprep.subr.mxu0 0.0
    %2146 = vmatpush1.msra.mxu0 0.0
    %2147 = vmatprep.subr.mxu0 0.0
    %2148 = vmatpush1.msra.mxu0 0.0
    %2149 = vmatprep.subr.mxu0 0.0
    %2150 = vmatpush1.msra.mxu0 0.0
    %2151 = vmatprep.subr.mxu0 0.0
    %2152 = vmatpush1.msra.mxu0 0.0
    %2153 = vmatprep.subr.mxu0 0.0
    %2154 = vmatpush1.msra.mxu0 0.0
    %2155 = vmatprep.subr.mxu0 0.0
    %2156 = vmatpush1.msra.mxu0 0.0
    %2157 = vmatprep.subr.mxu0 0.0
    %2158 = vmatpush1.msra.mxu0 0.0
    %2159 = vmatprep.subr.mxu0 0.0
    %2160 = vmatpush1.msra.mxu0 0.0
    %2161 = vmatprep.subr.mxu0 0.0
    %2162 = vmatpush1.msra.mxu0 0.0
    %2163 = vmatprep.subr.mxu0 0.0
    %2164 = vmatpush1.msra.mxu0 0.0
    %2165 = vmatprep.subr.mxu0 0.0
    %2166 = vmatpush1.msra.mxu0 0.0
    %2167 = vmatprep.subr.mxu0 0.0
    %2168 = vmatpush1.msra.mxu0 0.0
    %2169 = vmatprep.subr.mxu0 0.0
    %2170 = vmatpush1.msra.mxu0 0.0
    %2171 = vmatprep.subr.mxu0 0.0
    %2172 = vmatpush1.msra.mxu0 0.0
    %2173 = vmatprep.subr.mxu0 0.0
    %2174 = vmatpush1.msra.mxu0 0.0
    %2175 = vmatprep.subr.mxu0 0.0
    %2176 = vmatpush1.msra.mxu0 0.0
    %2177 = vmatprep.subr.mxu0 0.0
    %2178 = vmatpush1.msra.mxu0 0.0
    %2179 = vmatprep.subr.mxu0 0.0
    %2180 = vmatpush1.msra.mxu0 0.0
    %2181 = vmatprep.subr.mxu0 0.0
    %2182 = vmatpush1.msra.mxu0 0.0
    %2183 = vmatprep.subr.mxu0 0.0
    %2184 = vmatpush1.msra.mxu0 0.0
    %2185 = vmatprep.subr.mxu0 0.0
    %2186 = vmatpush1.msra.mxu0 0.0
    %2187 = vmatprep.subr.mxu0 0.0
    %2188 = vmatpush1.msra.mxu0 0.0
    %2189 = vmatprep.subr.mxu0 0.0
    %2190 = vmatpush1.msra.mxu0 0.0
    %2191 = vmatprep.subr.mxu0 0.0
    %2192 = vmatpush1.msra.mxu0 0.0
    %2193 = vmatprep.mubr.f32.mxu0 0.0
    %2194 = vmatmul.mubr.f32.gmra.mrb[0].mxu0 %v2127
    %v2195 = vpop.f32.mrb[0].mxu0
    %v2196 = vadd.f32 0.0, %v2195
    %v2197 = vpop.f32.mrb[0].mxu0
    %2198 = vdwg.mxu0
    %v2199 = vpack.c.bf16 %v2196, %v2196
    %v2200 = vld [vmem:[%s3] sm:$0xf]
    %v2201 = vld [vmem:[%s3 + $0x4] sm:$0xf]
    %v2202 = vld [vmem:[%s3 + $0x8] sm:$0xf]
    %v2203 = vld [vmem:[%s3 + $0xc] sm:$0xf]
    %v2204 = vld [vmem:[%s3 + $0x10] sm:$0xf]
    %v2205 = vld [vmem:[%s3 + $0x14] sm:$0xf]
    %v2206 = vld [vmem:[%s3 + $0x18] sm:$0xf]
    %v2207 = vld [vmem:[%s3 + $0x1c] sm:$0xf]
    %v2208 = vld [vmem:[%s3 + $0x20] sm:$0xf]
    %v2209 = vld [vmem:[%s3 + $0x24] sm:$0xf]
    %v2210 = vld [vmem:[%s3 + $0x28] sm:$0xf]
    %v2211 = vld [vmem:[%s3 + $0x2c] sm:$0xf]
    %v2212 = vld [vmem:[%s3 + $0x30] sm:$0x3]
    %v2213 = vlaneseq
    %v2214 = vshrl.u32 %v2213, 7
    %v2215 = vsub.s32 0, %v2214
    %v2216 = vrot.slane %v51, %v2215
    %v2230 = vunpack.c.l.b16 %v2200
    %v2231 = vunpack.c.l.b16 %v2201
    %v2232 = vunpack.c.l.b16 %v2202
    %v2233 = vunpack.c.l.b16 %v2203
    %v2234 = vunpack.c.l.b16 %v2204
    %v2235 = vunpack.c.l.b16 %v2205
    %v2236 = vunpack.c.l.b16 %v2206
    %v2237 = vunpack.c.l.b16 %v2207
    %v2238 = vunpack.c.l.b16 %v2208
    %v2239 = vunpack.c.l.b16 %v2209
    %v2240 = vunpack.c.l.b16 %v2210
    %v2241 = vunpack.c.l.b16 %v2211
    %v2242 = vunpack.c.l.b16 %v2212
    %v2243 = vpack.c.b16 %v2231, %v2230
    %v2244 = vpack.c.b16 %v2233, %v2232
    %v2245 = vpack.c.b16 %v2235, %v2234
    %v2246 = vpack.c.b16 %v2237, %v2236
    %v2247 = vpack.c.b16 %v2239, %v2238
    %v2248 = vpack.c.b16 %v2241, %v2240
    %v2249 = vpack.c.b16 %v2242, %v2242
    %vm2256 = vcmask 818176
    %v2258 = vsel %vm2256, %v2199, 0
    %vm2260 = vcmask 1041408
    %v2262 = vsel %vm2260, %v2249, 0
    %2264 = vmatprep.subr.bf16.mxu0 0
    %2265 = vmatpush1.bf16.msra.mxu0 %v2243
    %2266 = vmatprep.subr.bf16.mxu0 0
    %2267 = vmatpush1.bf16.msra.mxu0 %v2244
    %2268 = vmatprep.subr.bf16.mxu0 0
    %2269 = vmatpush1.bf16.msra.mxu0 %v2245
    %2270 = vmatprep.subr.bf16.mxu0 0
    %2271 = vmatpush1.bf16.msra.mxu0 %v2246
    %2272 = vmatprep.subr.bf16.mxu0 0
    %2273 = vmatpush1.bf16.msra.mxu0 %v2247
    %2274 = vmatprep.subr.bf16.mxu0 0
    %2275 = vmatpush1.bf16.msra.mxu0 %v2248
    %2276 = vmatprep.subr.bf16.mxu0 0
    %2277 = vmatpush1.bf16.msra.mxu0 %v2262
    %2278 = vmatprep.subr.bf16.mxu0 0
    %2279 = vmatpush1.bf16.msra.mxu0 0
    %2280 = vmatprep.subr.bf16.mxu0 0
    %2281 = vmatpush1.bf16.msra.mxu0 0
    %2282 = vmatprep.subr.bf16.mxu0 0
    %2283 = vmatpush1.bf16.msra.mxu0 0
    %2284 = vmatprep.subr.bf16.mxu0 0
    %2285 = vmatpush1.bf16.msra.mxu0 0
    %2286 = vmatprep.subr.bf16.mxu0 0
    %2287 = vmatpush1.bf16.msra.mxu0 0
    %2288 = vmatprep.subr.bf16.mxu0 0
    %2289 = vmatpush1.bf16.msra.mxu0 0
    %2290 = vmatprep.subr.bf16.mxu0 0
    %2291 = vmatpush1.bf16.msra.mxu0 0
    %2292 = vmatprep.subr.bf16.mxu0 0
    %2293 = vmatpush1.bf16.msra.mxu0 0
    %2294 = vmatprep.subr.bf16.mxu0 0
    %2295 = vmatpush1.bf16.msra.mxu0 0
    %2296 = vmatprep.mubr.bf16.mxu0 0
    %2297 = vmatmul.mubr.bf16.gmra.mrb[0].mxu0 %v2258
    %v2298 = vpop.f32.mrb[0].mxu0
    %v2299 = vadd.f32 %v2216, %v2298
    %v2300 = vpop.f32.mrb[0].mxu0
    %v2301 = vpop.f32.mrb[0].mxu0
    %v2302 = vpop.f32.mrb[0].mxu0
    %2303 = vdwg.mxu0
    %v2304 = vsub.f32 0.0, %v2299
    %v2305 = vmul.f32 %v2304, 1.442695
    %v2306 = vpow.pop %v2305
    %v2307 = vadd.f32 %v2306, 1.0
    %v2308 = vrcp.pop %v2307
    %v2309 = vpack.c.bf16 %v2308, %v2308
    %v2310 = vld [vmem:[%s4] sm:$0xf]
    %v2311 = vld [vmem:[%s4 + $0x4] sm:$0xf]
    %v2312 = vld [vmem:[%s4 + $0x8] sm:$0xf]
    %v2313 = vld [vmem:[%s4 + $0xc] sm:$0xf]
    %v2314 = vld [vmem:[%s4 + $0x10] sm:$0xf]
    %v2315 = vld [vmem:[%s4 + $0x14] sm:$0xf]
    %v2316 = vld [vmem:[%s4 + $0x18] sm:$0xf]
    %v2317 = vld [vmem:[%s4 + $0x1c] sm:$0xf]
    %v2318 = vld [vmem:[%s4 + $0x20] sm:$0xf]
    %v2319 = vld [vmem:[%s4 + $0x24] sm:$0xf]
    %v2320 = vld [vmem:[%s4 + $0x28] sm:$0xf]
    %v2321 = vld [vmem:[%s4 + $0x2c] sm:$0xf]
    %v2322 = vld [vmem:[%s4 + $0x30] sm:$0x3]
    %v2323 = vlaneseq
    %v2324 = vshrl.u32 %v2323, 7
    %v2325 = vsub.s32 0, %v2324
    %v2326 = vrot.slane %v52, %v2325
    %v2340 = vunpack.c.l.b16 %v2310
    %v2341 = vunpack.c.l.b16 %v2311
    %v2342 = vunpack.c.l.b16 %v2312
    %v2343 = vunpack.c.l.b16 %v2313
    %v2344 = vunpack.c.l.b16 %v2314
    %v2345 = vunpack.c.l.b16 %v2315
    %v2346 = vunpack.c.l.b16 %v2316
    %v2347 = vunpack.c.l.b16 %v2317
    %v2348 = vunpack.c.l.b16 %v2318
    %v2349 = vunpack.c.l.b16 %v2319
    %v2350 = vunpack.c.l.b16 %v2320
    %v2351 = vunpack.c.l.b16 %v2321
    %v2352 = vunpack.c.l.b16 %v2322
    %v2353 = vpack.c.b16 %v2341, %v2340
    %v2354 = vpack.c.b16 %v2343, %v2342
    %v2355 = vpack.c.b16 %v2345, %v2344
    %v2356 = vpack.c.b16 %v2347, %v2346
    %v2357 = vpack.c.b16 %v2349, %v2348
    %v2358 = vpack.c.b16 %v2351, %v2350
    %v2359 = vpack.c.b16 %v2352, %v2352
    %v2367 = vsel %vm2256, %v2309, 0
    %v2370 = vsel %vm2260, %v2359, 0
    %2372 = vmatprep.subr.bf16.mxu0 0
    %2373 = vmatpush1.bf16.msra.mxu0 %v2353
    %2374 = vmatprep.subr.bf16.mxu0 0
    %2375 = vmatpush1.bf16.msra.mxu0 %v2354
    %2376 = vmatprep.subr.bf16.mxu0 0
    %2377 = vmatpush1.bf16.msra.mxu0 %v2355
    %2378 = vmatprep.subr.bf16.mxu0 0
    %2379 = vmatpush1.bf16.msra.mxu0 %v2356
    %2380 = vmatprep.subr.bf16.mxu0 0
    %2381 = vmatpush1.bf16.msra.mxu0 %v2357
    %2382 = vmatprep.subr.bf16.mxu0 0
    %2383 = vmatpush1.bf16.msra.mxu0 %v2358
    %2384 = vmatprep.subr.bf16.mxu0 0
    %2385 = vmatpush1.bf16.msra.mxu0 %v2370
    %2386 = vmatprep.subr.bf16.mxu0 0
    %2387 = vmatpush1.bf16.msra.mxu0 0
    %2388 = vmatprep.subr.bf16.mxu0 0
    %2389 = vmatpush1.bf16.msra.mxu0 0
    %2390 = vmatprep.subr.bf16.mxu0 0
    %2391 = vmatpush1.bf16.msra.mxu0 0
    %2392 = vmatprep.subr.bf16.mxu0 0
    %2393 = vmatpush1.bf16.msra.mxu0 0
    %2394 = vmatprep.subr.bf16.mxu0 0
    %2395 = vmatpush1.bf16.msra.mxu0 0
    %2396 = vmatprep.subr.bf16.mxu0 0
    %2397 = vmatpush1.bf16.msra.mxu0 0
    %2398 = vmatprep.subr.bf16.mxu0 0
    %2399 = vmatpush1.bf16.msra.mxu0 0
    %2400 = vmatprep.subr.bf16.mxu0 0
    %2401 = vmatpush1.bf16.msra.mxu0 0
    %2402 = vmatprep.subr.bf16.mxu0 0
    %2403 = vmatpush1.bf16.msra.mxu0 0
    %2404 = vmatprep.mubr.bf16.mxu0 0
    %2405 = vmatmul.mubr.bf16.gmra.mrb[0].mxu0 %v2367
    %v2406 = vpop.f32.mrb[0].mxu0
    %v2407 = vadd.f32 %v2326, %v2406
    %v2408 = vpop.f32.mrb[0].mxu0
    %v2409 = vpop.f32.mrb[0].mxu0
    %v2410 = vpop.f32.mrb[0].mxu0
    %2411 = vdwg.mxu0
    %2412 = vst [vmem:[#allocation8] sm:$0x3] %v2407
    // Predicated region
    $region30: #{cnn_baseline_forward.1} parent=1 // pred_check
      _
    $region31: #{cnn_baseline_forward.1} parent=1 // pred_check_branch
      %2414 = sbr.rel (0) target = $region33
    $region32: #{cnn_baseline_forward.1} parent=1 // pred_region
      %s2416 = ssub.s32 32, 32
      %2417 = vsyncadd [#allocation5], %s2416
      %s2419 = sshll.u32 [#allocation8], 4
      %s2420 = int_to_ptr.vmem [resolvable:$true] %s2419
      %2422 = dma.vmem_to_hbm [thread:$0]  %s2420, 32, %s5, [#allocation5]
    $region33: #{cnn_baseline_forward.1} parent=1 // pred_fallthru
      _
    // Predicated region
    $region34: #{cnn_baseline_forward.1} parent=1 // pred_check
      _
    $region35: #{cnn_baseline_forward.1} parent=1 // pred_check_branch
      %2424 = sbr.rel (0) target = $region37
    $region36: #{cnn_baseline_forward.1} parent=1 // pred_region
      %2425 = dma.done [#allocation5], 32
    $region37: #{cnn_baseline_forward.1} parent=1 // pred_fallthru
      _
    %2426 = vsyncpa [#allocation4], 1
    %2427 = vsyncpa [#allocation7], 1
    %2428 = vsyncpa [#allocation5], 1

</llo_original>
